<compile_context>
chip_gen: v5e
topology: v5e:2x2
jax: 0.10.0
libtpu: 0.0.40
codegen_flags: <defaults>
</compile_context>

<pallas_src>
import jax
import jax.numpy as jnp
from jax.experimental import pallas as pl
from jax.experimental.pallas import tpu as pltpu

IN_FEATURES = 28 * 28   # 784
HIDDEN = 512
OUT_FEATURES = 10
K_PAD = 896             # 7 * 128 : lane-aligned flattened-input width
N_PAD = 128             # lane-dense final output slab


def _round_up(x, m):
    return (x + m - 1) // m * m


def mlp_kernel(x_ref, w1_ref, b1_ref, w2_ref, b2_ref, w3_ref, b3_ref, o_ref):
    """One batch tile of the 3-layer MLP.

    x / weights arrive as bf16 (native MXU path); accumulation, bias add and
    ReLU are in f32, then re-cast to bf16 to feed the next matmul.
    """
    x = x_ref[...]                                                   # [BM, 896] bf16
    h1 = jnp.dot(x, w1_ref[...], preferred_element_type=jnp.float32) + b1_ref[...]
    h1 = jnp.maximum(h1, 0.0).astype(jnp.bfloat16)                   # [BM, 512]
    h2 = jnp.dot(h1, w2_ref[...], preferred_element_type=jnp.float32) + b2_ref[...]
    h2 = jnp.maximum(h2, 0.0).astype(jnp.bfloat16)                   # [BM, 512]
    logits = jnp.dot(h2, w3_ref[...], preferred_element_type=jnp.float32) + b3_ref[...]
    o_ref[...] = logits.astype(o_ref.dtype)                          # [BM, 128] f32


def neural_network_forward(x, params, *, bm=256):
    """x: [B, 28, 28] float32 -> logits [B, 10] float32."""
    w1, b1, w2, b2, w3, b3 = params
    B = x.shape[0]
    x_flat = x.reshape(B, IN_FEATURES)                               # nn.Flatten()

    # ---- lane-friendly zero-padding + bf16 casts (once, outside the kernel) ----
    x_p = jnp.pad(x_flat, ((0, 0), (0, K_PAD - IN_FEATURES))).astype(jnp.bfloat16)
    w1_p = jnp.pad(w1, ((0, K_PAD - IN_FEATURES), (0, 0))).astype(jnp.bfloat16)
    w2_c = w2.astype(jnp.bfloat16)
    w3_p = jnp.pad(w3, ((0, 0), (0, N_PAD - OUT_FEATURES))).astype(jnp.bfloat16)
    b3_p = jnp.pad(b3, ((0, 0), (0, N_PAD - OUT_FEATURES)))          # f32, zero pad

    # ---- batch tiling: BM rows per grid step, weights stay VMEM-resident ----
    BM = min(bm, _round_up(B, 8))
    B_pad = _round_up(B, BM)
    if B_pad != B:
        x_p = jnp.pad(x_p, ((0, B_pad - B), (0, 0)))
    grid = (B_pad // BM,)

    def resident(arr):
        # Constant block index -> DMA'd once, kept in VMEM across all batch tiles.
        return pl.BlockSpec(arr.shape, lambda i: (0, 0))

    out = pl.pallas_call(
        mlp_kernel,
        out_shape=jax.ShapeDtypeStruct((B_pad, N_PAD), jnp.float32),
        grid=grid,
        in_specs=[
            pl.BlockSpec((BM, K_PAD), lambda i: (i, 0)),             # batch-tiled input
            resident(w1_p), resident(b1),
            resident(w2_c), resident(b2),
            resident(w3_p), resident(b3_p),
        ],
        out_specs=pl.BlockSpec((BM, N_PAD), lambda i: (i, 0)),       # lane-dense output
        compiler_params=pltpu.CompilerParams(
            dimension_semantics=("parallel",),                       # megacore on v7x
        ),
    )(x_p, w1_p, b1, w2_c, b2, w3_p, b3_p)

    return out[:B, :OUT_FEATURES]


def init_params(key):
    """Deterministic init matching nn.Linear's U(-1/sqrt(fan_in), 1/sqrt(fan_in))."""
    dims = [(IN_FEATURES, HIDDEN), (HIDDEN, HIDDEN), (HIDDEN, OUT_FEATURES)]
    params = []
    keys = jax.random.split(key, 2 * len(dims))
    for i, (fan_in, fan_out) in enumerate(dims):
        bound = 1.0 / jnp.sqrt(float(fan_in))
        w = jax.random.uniform(keys[2 * i], (fan_in, fan_out),
                               minval=-bound, maxval=bound, dtype=jnp.float32)
        b = jax.random.uniform(keys[2 * i + 1], (1, fan_out),
                               minval=-bound, maxval=bound, dtype=jnp.float32)
        params += [w, b]
    return tuple(params)


if __name__ == "__main__":
    key = jax.random.PRNGKey(0)
    k_x, k_p = jax.random.split(key)

    B = 2
    x = jax.random.uniform(k_x, (B, 28, 28), dtype=jnp.float32)
    params = init_params(k_p)

    logits = neural_network_forward(x, params)
    logits = jax.block_until_ready(logits)
    assert logits.shape == (B, OUT_FEATURES)

    # Reference in plain JAX with the same bf16-matmul / f32-accumulate recipe.
    w1, b1, w2, b2, w3, b3 = params
    xf = x.reshape(B, -1).astype(jnp.bfloat16)
    h = jnp.maximum(jnp.dot(xf, w1.astype(jnp.bfloat16),
                            preferred_element_type=jnp.float32) + b1, 0.0)
    h = jnp.maximum(jnp.dot(h.astype(jnp.bfloat16), w2.astype(jnp.bfloat16),
                            preferred_element_type=jnp.float32) + b2, 0.0)
    ref = jnp.dot(h.astype(jnp.bfloat16), w3.astype(jnp.bfloat16),
                  preferred_element_type=jnp.float32) + b3

    assert jnp.allclose(logits, ref, atol=2e-2, rtol=2e-2), \
        float(jnp.max(jnp.abs(logits - ref)))

    print("KERNEL_OK")
</pallas_src>

<mosaic_0001>
module attributes {stable_mosaic.version = 11 : i64} {
  func.func @mlp_kernel(%arg0: i32, %arg1: memref<8x896xbf16, #tpu.memory_space<vmem>>, %arg2: memref<896x512xbf16, #tpu.memory_space<vmem>>, %arg3: memref<1x512xf32, #tpu.memory_space<vmem>>, %arg4: memref<512x512xbf16, #tpu.memory_space<vmem>>, %arg5: memref<1x512xf32, #tpu.memory_space<vmem>>, %arg6: memref<512x128xbf16, #tpu.memory_space<vmem>>, %arg7: memref<1x128xf32, #tpu.memory_space<vmem>>, %arg8: memref<8x128xf32, #tpu.memory_space<vmem>>) attributes {dimension_semantics = [#tpu.dimension_semantics<parallel>], iteration_bounds = array<i64: 1>, scalar_prefetch = 0 : i64, scratch_operands = 0 : i64, tpu.core_type = #tpu.core_type<tc>, window_params = [{transform_indices = @transform_0, window_bounds = array<i64: 8, 896>}, {pipeline_mode = #tpu.pipeline_mode<synchronous>, transform_indices = @transform_1, window_bounds = array<i64: 896, 512>}, {pipeline_mode = #tpu.pipeline_mode<synchronous>, transform_indices = @transform_2, window_bounds = array<i64: 1, 512>}, {pipeline_mode = #tpu.pipeline_mode<synchronous>, transform_indices = @transform_3, window_bounds = array<i64: 512, 512>}, {pipeline_mode = #tpu.pipeline_mode<synchronous>, transform_indices = @transform_4, window_bounds = array<i64: 1, 512>}, {pipeline_mode = #tpu.pipeline_mode<synchronous>, transform_indices = @transform_5, window_bounds = array<i64: 512, 128>}, {pipeline_mode = #tpu.pipeline_mode<synchronous>, transform_indices = @transform_6, window_bounds = array<i64: 1, 128>}, {transform_indices = @transform_7, window_bounds = array<i64: 8, 128>}]} {
    %c0 = arith.constant 0 : index
    %c0_0 = arith.constant 0 : index
    %0 = vector.load %arg1[%c0, %c0_0] : memref<8x896xbf16, #tpu.memory_space<vmem>>, vector<8x896xbf16>
    %c0_1 = arith.constant 0 : index
    %c0_2 = arith.constant 0 : index
    %1 = vector.load %arg2[%c0_1, %c0_2] : memref<896x512xbf16, #tpu.memory_space<vmem>>, vector<896x512xbf16>
    %cst = arith.constant dense<0.000000e+00> : vector<8x512xf32>
    %2 = tpu.matmul %0, %1, %cst {dimension_numbers = #tpu.dot_dimension_numbers<[1], [0], [0], [1], [0, 0, 1, 1], [], []>} : vector<8x896xbf16>, vector<896x512xbf16>, vector<8x512xf32> -> vector<8x512xf32>
    %c0_3 = arith.constant 0 : index
    %c0_4 = arith.constant 0 : index
    %3 = vector.load %arg3[%c0_3, %c0_4] : memref<1x512xf32, #tpu.memory_space<vmem>>, vector<1x512xf32>
    %4 = vector.broadcast %3 : vector<1x512xf32> to vector<8x512xf32>
    %5 = arith.addf %2, %4 : vector<8x512xf32>
    %cst_5 = arith.constant 0.000000e+00 : f32
    %6 = vector.broadcast %cst_5 : f32 to vector<8x512xf32>
    %7 = arith.maximumf %5, %6 : vector<8x512xf32>
    %8 = arith.truncf %7 : vector<8x512xf32> to vector<8x512xbf16>
    %c0_6 = arith.constant 0 : index
    %c0_7 = arith.constant 0 : index
    %9 = vector.load %arg4[%c0_6, %c0_7] : memref<512x512xbf16, #tpu.memory_space<vmem>>, vector<512x512xbf16>
    %cst_8 = arith.constant dense<0.000000e+00> : vector<8x512xf32>
    %10 = tpu.matmul %8, %9, %cst_8 {dimension_numbers = #tpu.dot_dimension_numbers<[1], [0], [0], [1], [0, 0, 1, 1], [], []>} : vector<8x512xbf16>, vector<512x512xbf16>, vector<8x512xf32> -> vector<8x512xf32>
    %c0_9 = arith.constant 0 : index
    %c0_10 = arith.constant 0 : index
    %11 = vector.load %arg5[%c0_9, %c0_10] : memref<1x512xf32, #tpu.memory_space<vmem>>, vector<1x512xf32>
    %12 = vector.broadcast %11 : vector<1x512xf32> to vector<8x512xf32>
    %13 = arith.addf %10, %12 : vector<8x512xf32>
    %cst_11 = arith.constant 0.000000e+00 : f32
    %14 = vector.broadcast %cst_11 : f32 to vector<8x512xf32>
    %15 = arith.maximumf %13, %14 : vector<8x512xf32>
    %16 = arith.truncf %15 : vector<8x512xf32> to vector<8x512xbf16>
    %c0_12 = arith.constant 0 : index
    %c0_13 = arith.constant 0 : index
    %17 = vector.load %arg6[%c0_12, %c0_13] : memref<512x128xbf16, #tpu.memory_space<vmem>>, vector<512x128xbf16>
    %cst_14 = arith.constant dense<0.000000e+00> : vector<8x128xf32>
    %18 = tpu.matmul %16, %17, %cst_14 {dimension_numbers = #tpu.dot_dimension_numbers<[1], [0], [0], [1], [0, 0, 1, 1], [], []>} : vector<8x512xbf16>, vector<512x128xbf16>, vector<8x128xf32> -> vector<8x128xf32>
    %c0_15 = arith.constant 0 : index
    %c0_16 = arith.constant 0 : index
    %19 = vector.load %arg7[%c0_15, %c0_16] : memref<1x128xf32, #tpu.memory_space<vmem>>, vector<1x128xf32>
    %20 = vector.broadcast %19 : vector<1x128xf32> to vector<8x128xf32>
    %21 = arith.addf %18, %20 : vector<8x128xf32>
    %c0_17 = arith.constant 0 : index
    %c0_18 = arith.constant 0 : index
    %22 = vector.load %arg8[%c0_17, %c0_18] : memref<8x128xf32, #tpu.memory_space<vmem>>, vector<8x128xf32>
    tpu.vector_store %arg8[%c0_17, %c0_18], %21 {strides = array<i32>} : memref<8x128xf32, #tpu.memory_space<vmem>>, vector<8x128xf32>,
    return
  }
  func.func @transform_0(%arg0: i32) -> (i32, i32) {
    %c0_i32 = arith.constant 0 : i32
    %c0_i32_0 = arith.constant 0 : i32
    return %arg0, %c0_i32 : i32, i32
  }
  func.func @transform_1(%arg0: i32) -> (i32, i32) {
    %c0_i32 = arith.constant 0 : i32
    %c0_i32_0 = arith.constant 0 : i32
    %c0_i32_1 = arith.constant 0 : i32
    return %c0_i32, %c0_i32_0 : i32, i32
  }
  func.func @transform_2(%arg0: i32) -> (i32, i32) {
    %c0_i32 = arith.constant 0 : i32
    %c0_i32_0 = arith.constant 0 : i32
    %c0_i32_1 = arith.constant 0 : i32
    return %c0_i32, %c0_i32_0 : i32, i32
  }
  func.func @transform_3(%arg0: i32) -> (i32, i32) {
    %c0_i32 = arith.constant 0 : i32
    %c0_i32_0 = arith.constant 0 : i32
    %c0_i32_1 = arith.constant 0 : i32
    return %c0_i32, %c0_i32_0 : i32, i32
  }
  func.func @transform_4(%arg0: i32) -> (i32, i32) {
    %c0_i32 = arith.constant 0 : i32
    %c0_i32_0 = arith.constant 0 : i32
    %c0_i32_1 = arith.constant 0 : i32
    return %c0_i32, %c0_i32_0 : i32, i32
  }
  func.func @transform_5(%arg0: i32) -> (i32, i32) {
    %c0_i32 = arith.constant 0 : i32
    %c0_i32_0 = arith.constant 0 : i32
    %c0_i32_1 = arith.constant 0 : i32
    return %c0_i32, %c0_i32_0 : i32, i32
  }
  func.func @transform_6(%arg0: i32) -> (i32, i32) {
    %c0_i32 = arith.constant 0 : i32
    %c0_i32_0 = arith.constant 0 : i32
    %c0_i32_1 = arith.constant 0 : i32
    return %c0_i32, %c0_i32_0 : i32, i32
  }
  func.func @transform_7(%arg0: i32) -> (i32, i32) {
    %c0_i32 = arith.constant 0 : i32
    %c0_i32_0 = arith.constant 0 : i32
    return %arg0, %c0_i32 : i32, i32
  }
}

</mosaic_0001>

<llo_original>
// kernel: tpu_custom_call.1
$region0: #{tpu_custom_call.1}
  #allocation0 [shape = 'u32[]', space=smem, size = 0x4, offset = 0x4, fixed_abs, tag = 'smem constant byte address 0x4 - core index']
  #allocation1 [shape = 'u32[72,128]{1,0:T(1,128)}', space=vmem, size = 0x9000, scoped, tag = 'internal scratch']
  %s0 = inlined_call_operand.hbm [shape: bf16[8,896], index: 0, kind: input, shape index: {}]
  %s1 = inlined_call_operand.hbm [shape: bf16[896,512], index: 1, kind: input, shape index: {}]
  %s2 = inlined_call_operand.hbm [shape: f32[1,512], index: 2, kind: input, shape index: {}]
  %s3 = inlined_call_operand.hbm [shape: bf16[512,512], index: 3, kind: input, shape index: {}]
  %s4 = inlined_call_operand.hbm [shape: f32[1,512], index: 4, kind: input, shape index: {}]
  %s5 = inlined_call_operand.hbm [shape: bf16[512,128], index: 5, kind: input, shape index: {}]
  %s6 = inlined_call_operand.vmem [shape: f32[1,128], index: 6, kind: input, shape index: {}]
  %s7 = inlined_call_operand.hbm [shape: f32[8,128], index: 7, kind: output, shape index: {}]
  %s8 = sld [smem:[#allocation0]]
  $region62: #{tpu_custom_call.1} parent=0
    _
  %s10 = ssub.s32 1, %s8
  %s11 = scalar_select 0, %s10, %s8
  $region1: #{tpu_custom_call.1} parent=0
    #allocation2 [shape = 'u8[14336]{0}', space=vmem, size = 0x3800, scoped, tag = 'input window, operand 0, single buffered']
    #allocation3 [shape = 's32[1]{0}', space=sflag, size = 0x4, scoped, tag = 'scoped memory for tpu_custom_call.1']
    #allocation4 [shape = 's32[1]{0}', space=sflag, size = 0x4, scoped, tag = 'scoped memory for tpu_custom_call.1']
    #allocation5 [shape = 'u8[917504]{0}', space=vmem, size = 0xe0000, scoped, tag = 'input window, operand 1, single buffered']
    #allocation6 [shape = 's32[1]{0}', space=sflag, size = 0x4, scoped, tag = 'scoped memory for tpu_custom_call.1']
    #allocation7 [shape = 'u8[2048]{0}', space=vmem, size = 0x800, scoped, tag = 'input window, operand 2, single buffered']
    #allocation8 [shape = 'u8[524288]{0}', space=vmem, size = 0x80000, scoped, tag = 'input window, operand 3, single buffered']
    #allocation9 [shape = 's32[1]{0}', space=sflag, size = 0x4, scoped, tag = 'scoped memory for tpu_custom_call.1']
    #allocation10 [shape = 'u8[2048]{0}', space=vmem, size = 0x800, scoped, tag = 'input window, operand 4, single buffered']
    #allocation11 [shape = 'u8[131072]{0}', space=vmem, size = 0x20000, scoped, tag = 'input window, operand 5, single buffered']
    #allocation12 [shape = 's32[1]{0}', space=sflag, size = 0x4, scoped, tag = 'scoped memory for tpu_custom_call.1']
    #allocation13 [shape = 'u8[4096]{0}', space=vmem, size = 0x1000, scoped, tag = 'output window, operand 0, single buffered']
    %12 = vsyncpa [#allocation3], 0
    %13 = vsyncpa [#allocation6], 0
    %14 = vsyncpa [#allocation9], 0
    %15 = vsyncpa [#allocation12], 0
    %16 = vsyncpa [#allocation4], 0
    // Predicated region
    $region2: #{tpu_custom_call.1} parent=1 // pred_check
      _
    $region3: #{tpu_custom_call.1} parent=1 // pred_check_branch
      %18 = sbr.rel (0) target = $region5
    $region4: #{tpu_custom_call.1} parent=1 // pred_region
      %20 = vsyncadd [#allocation3], 0
      %s22 = sshll.u32 %s0, 4
      %s23 = int_to_ptr.hbm [resolvable:$true] %s22
      %s24 = sshll.u32 [#allocation2], 4
      %s25 = int_to_ptr.vmem [resolvable:$true] %s24
      %27 = dma.hbm_to_vmem [thread:$0]  %s23, 448, %s25, [#allocation3]
    $region5: #{tpu_custom_call.1} parent=1 // pred_fallthru
      _
    // Predicated region
    $region6: #{tpu_custom_call.1} parent=1 // pred_check
      _
    $region7: #{tpu_custom_call.1} parent=1 // pred_check_branch
      %29 = sbr.rel (0) target = $region9
    $region8: #{tpu_custom_call.1} parent=1 // pred_region
      %31 = vsyncadd [#allocation6], 0
      %s32 = sshll.u32 %s1, 4
      %s33 = int_to_ptr.hbm [resolvable:$true] %s32
      %s34 = sshll.u32 [#allocation5], 4
      %s35 = int_to_ptr.vmem [resolvable:$true] %s34
      %40 = dma.hbm_to_vmem [thread:$0]  %s33, 28672, %s35, [#allocation6], 256, 256, 16
    $region9: #{tpu_custom_call.1} parent=1 // pred_fallthru
      _
    // Predicated region
    $region10: #{tpu_custom_call.1} parent=1 // pred_check
      _
    $region11: #{tpu_custom_call.1} parent=1 // pred_check_branch
      %42 = sbr.rel (0) target = $region13
    $region12: #{tpu_custom_call.1} parent=1 // pred_region
      %44 = vsyncadd [#allocation6], 0
      %s46 = sshll.u32 %s2, 4
      %s47 = int_to_ptr.hbm [resolvable:$true] %s46
      %s48 = sshll.u32 [#allocation7], 4
      %s49 = int_to_ptr.vmem [resolvable:$true] %s48
      %51 = dma.hbm_to_vmem [thread:$0]  %s47, 64, %s49, [#allocation6]
    $region13: #{tpu_custom_call.1} parent=1 // pred_fallthru
      _
    // Predicated region
    $region14: #{tpu_custom_call.1} parent=1 // pred_check
      _
    $region15: #{tpu_custom_call.1} parent=1 // pred_check_branch
      %53 = sbr.rel (0) target = $region17
    $region16: #{tpu_custom_call.1} parent=1 // pred_region
      %55 = vsyncadd [#allocation9], 0
      %s56 = sshll.u32 %s3, 4
      %s57 = int_to_ptr.hbm [resolvable:$true] %s56
      %s58 = sshll.u32 [#allocation8], 4
      %s59 = int_to_ptr.vmem [resolvable:$true] %s58
      %64 = dma.hbm_to_vmem [thread:$0]  %s57, 16384, %s59, [#allocation9], 256, 256, 16
    $region17: #{tpu_custom_call.1} parent=1 // pred_fallthru
      _
    // Predicated region
    $region18: #{tpu_custom_call.1} parent=1 // pred_check
      _
    $region19: #{tpu_custom_call.1} parent=1 // pred_check_branch
      %66 = sbr.rel (0) target = $region21
    $region20: #{tpu_custom_call.1} parent=1 // pred_region
      %68 = vsyncadd [#allocation9], 0
      %s70 = sshll.u32 %s4, 4
      %s71 = int_to_ptr.hbm [resolvable:$true] %s70
      %s72 = sshll.u32 [#allocation10], 4
      %s73 = int_to_ptr.vmem [resolvable:$true] %s72
      %75 = dma.hbm_to_vmem [thread:$0]  %s71, 64, %s73, [#allocation9]
    $region21: #{tpu_custom_call.1} parent=1 // pred_fallthru
      _
    // Predicated region
    $region22: #{tpu_custom_call.1} parent=1 // pred_check
      _
    $region23: #{tpu_custom_call.1} parent=1 // pred_check_branch
      %77 = sbr.rel (0) target = $region25
    $region24: #{tpu_custom_call.1} parent=1 // pred_region
      %79 = vsyncadd [#allocation12], 0
      %s80 = sshll.u32 %s5, 4
      %s81 = int_to_ptr.hbm [resolvable:$true] %s80
      %s82 = sshll.u32 [#allocation11], 4
      %s83 = int_to_ptr.vmem [resolvable:$true] %s82
      %88 = dma.hbm_to_vmem [thread:$0]  %s81, 4096, %s83, [#allocation12], 64, 64, 4
    $region25: #{tpu_custom_call.1} parent=1 // pred_fallthru
      _
    // Predicated region
    $region26: #{tpu_custom_call.1} parent=1 // pred_check
      _
    $region27: #{tpu_custom_call.1} parent=1 // pred_check_branch
      %90 = sbr.rel (0) target = $region29
    $region28: #{tpu_custom_call.1} parent=1 // pred_region
      _
    $region29: #{tpu_custom_call.1} parent=1 // pred_fallthru
      _
    // Predicated region
    $region30: #{tpu_custom_call.1} parent=1 // pred_check
      _
    $region31: #{tpu_custom_call.1} parent=1 // pred_check_branch
      %92 = sbr.rel (0) target = $region33
    $region32: #{tpu_custom_call.1} parent=1 // pred_region
      %94 = dma.done [#allocation3], 448
    $region33: #{tpu_custom_call.1} parent=1 // pred_fallthru
      _
    // Predicated region
    $region34: #{tpu_custom_call.1} parent=1 // pred_check
      _
    $region35: #{tpu_custom_call.1} parent=1 // pred_check_branch
      %96 = sbr.rel (0) target = $region37
    $region36: #{tpu_custom_call.1} parent=1 // pred_region
      %98 = dma.done [#allocation6], 28672
    $region37: #{tpu_custom_call.1} parent=1 // pred_fallthru
      _
    // Predicated region
    $region38: #{tpu_custom_call.1} parent=1 // pred_check
      _
    $region39: #{tpu_custom_call.1} parent=1 // pred_check_branch
      %100 = sbr.rel (0) target = $region41
    $region40: #{tpu_custom_call.1} parent=1 // pred_region
      %102 = dma.done [#allocation6], 64
    $region41: #{tpu_custom_call.1} parent=1 // pred_fallthru
      _
    // Predicated region
    $region42: #{tpu_custom_call.1} parent=1 // pred_check
      _
    $region43: #{tpu_custom_call.1} parent=1 // pred_check_branch
      %104 = sbr.rel (0) target = $region45
    $region44: #{tpu_custom_call.1} parent=1 // pred_region
      %106 = dma.done [#allocation9], 16384
    $region45: #{tpu_custom_call.1} parent=1 // pred_fallthru
      _
    // Predicated region
    $region46: #{tpu_custom_call.1} parent=1 // pred_check
      _
    $region47: #{tpu_custom_call.1} parent=1 // pred_check_branch
      %108 = sbr.rel (0) target = $region49
    $region48: #{tpu_custom_call.1} parent=1 // pred_region
      %110 = dma.done [#allocation9], 64
    $region49: #{tpu_custom_call.1} parent=1 // pred_fallthru
      _
    // Predicated region
    $region50: #{tpu_custom_call.1} parent=1 // pred_check
      _
    $region51: #{tpu_custom_call.1} parent=1 // pred_check_branch
      %112 = sbr.rel (0) target = $region53
    $region52: #{tpu_custom_call.1} parent=1 // pred_region
      %114 = dma.done [#allocation12], 4096
    $region53: #{tpu_custom_call.1} parent=1 // pred_fallthru
      _
    %v115 = vld [vmem:[#allocation2] sm:$0xff]
    %v116 = vld [vmem:[#allocation2 + $0x8] sm:$0xff]
    %v117 = vld [vmem:[#allocation2 + $0x10] sm:$0xff]
    %v118 = vld [vmem:[#allocation2 + $0x18] sm:$0xf]
    %v119 = vld [vmem:[#allocation5] sm:$0xff]
    %v120 = vld [vmem:[#allocation5 + $0x8] sm:$0xff]
    %v121 = vld [vmem:[#allocation5 + $0x10] sm:$0xff]
    %v122 = vld [vmem:[#allocation5 + $0x18] sm:$0xff]
    %v123 = vld [vmem:[#allocation5 + $0x20] sm:$0xff]
    %v124 = vld [vmem:[#allocation5 + $0x28] sm:$0xff]
    %v125 = vld [vmem:[#allocation5 + $0x30] sm:$0xff]
    %v126 = vld [vmem:[#allocation5 + $0x38] sm:$0xff]
    %v127 = vld [vmem:[#allocation5 + $0x40] sm:$0xff]
    %v128 = vld [vmem:[#allocation5 + $0x48] sm:$0xff]
    %v129 = vld [vmem:[#allocation5 + $0x50] sm:$0xff]
    %v130 = vld [vmem:[#allocation5 + $0x58] sm:$0xff]
    %v131 = vld [vmem:[#allocation5 + $0x60] sm:$0xff]
    %v132 = vld [vmem:[#allocation5 + $0x68] sm:$0xff]
    %v133 = vld [vmem:[#allocation5 + $0x70] sm:$0xff]
    %v134 = vld [vmem:[#allocation5 + $0x78] sm:$0xff]
    %v135 = vld [vmem:[#allocation5 + $0x80] sm:$0xff]
    %v136 = vld [vmem:[#allocation5 + $0x88] sm:$0xff]
    %v137 = vld [vmem:[#allocation5 + $0x90] sm:$0xff]
    %v138 = vld [vmem:[#allocation5 + $0x98] sm:$0xff]
    %v139 = vld [vmem:[#allocation5 + $0xa0] sm:$0xff]
    %v140 = vld [vmem:[#allocation5 + $0xa8] sm:$0xff]
    %v141 = vld [vmem:[#allocation5 + $0xb0] sm:$0xff]
    %v142 = vld [vmem:[#allocation5 + $0xb8] sm:$0xff]
    %v143 = vld [vmem:[#allocation5 + $0xc0] sm:$0xff]
    %v144 = vld [vmem:[#allocation5 + $0xc8] sm:$0xff]
    %v145 = vld [vmem:[#allocation5 + $0xd0] sm:$0xff]
    %v146 = vld [vmem:[#allocation5 + $0xd8] sm:$0xff]
    %v147 = vld [vmem:[#allocation5 + $0xe0] sm:$0xff]
    %v148 = vld [vmem:[#allocation5 + $0xe8] sm:$0xff]
    %v149 = vld [vmem:[#allocation5 + $0xf0] sm:$0xff]
    %v150 = vld [vmem:[#allocation5 + $0xf8] sm:$0xff]
    %v151 = vld [vmem:[#allocation5 + $0x100] sm:$0xff]
    %v152 = vld [vmem:[#allocation5 + $0x108] sm:$0xff]
    %v153 = vld [vmem:[#allocation5 + $0x110] sm:$0xff]
    %v154 = vld [vmem:[#allocation5 + $0x118] sm:$0xff]
    %v155 = vld [vmem:[#allocation5 + $0x120] sm:$0xff]
    %v156 = vld [vmem:[#allocation5 + $0x128] sm:$0xff]
    %v157 = vld [vmem:[#allocation5 + $0x130] sm:$0xff]
    %v158 = vld [vmem:[#allocation5 + $0x138] sm:$0xff]
    %v159 = vld [vmem:[#allocation5 + $0x140] sm:$0xff]
    %v160 = vld [vmem:[#allocation5 + $0x148] sm:$0xff]
    %v161 = vld [vmem:[#allocation5 + $0x150] sm:$0xff]
    %v162 = vld [vmem:[#allocation5 + $0x158] sm:$0xff]
    %v163 = vld [vmem:[#allocation5 + $0x160] sm:$0xff]
    %v164 = vld [vmem:[#allocation5 + $0x168] sm:$0xff]
    %v165 = vld [vmem:[#allocation5 + $0x170] sm:$0xff]
    %v166 = vld [vmem:[#allocation5 + $0x178] sm:$0xff]
    %v167 = vld [vmem:[#allocation5 + $0x180] sm:$0xff]
    %v168 = vld [vmem:[#allocation5 + $0x188] sm:$0xff]
    %v169 = vld [vmem:[#allocation5 + $0x190] sm:$0xff]
    %v170 = vld [vmem:[#allocation5 + $0x198] sm:$0xff]
    %v171 = vld [vmem:[#allocation5 + $0x1a0] sm:$0xff]
    %v172 = vld [vmem:[#allocation5 + $0x1a8] sm:$0xff]
    %v173 = vld [vmem:[#allocation5 + $0x1b0] sm:$0xff]
    %v174 = vld [vmem:[#allocation5 + $0x1b8] sm:$0xff]
    %v175 = vld [vmem:[#allocation5 + $0x1c0] sm:$0xff]
    %v176 = vld [vmem:[#allocation5 + $0x1c8] sm:$0xff]
    %v177 = vld [vmem:[#allocation5 + $0x1d0] sm:$0xff]
    %v178 = vld [vmem:[#allocation5 + $0x1d8] sm:$0xff]
    %v179 = vld [vmem:[#allocation5 + $0x1e0] sm:$0xff]
    %v180 = vld [vmem:[#allocation5 + $0x1e8] sm:$0xff]
    %v181 = vld [vmem:[#allocation5 + $0x1f0] sm:$0xff]
    %v182 = vld [vmem:[#allocation5 + $0x1f8] sm:$0xff]
    %v183 = vld [vmem:[#allocation5 + $0x200] sm:$0xff]
    %v184 = vld [vmem:[#allocation5 + $0x208] sm:$0xff]
    %v185 = vld [vmem:[#allocation5 + $0x210] sm:$0xff]
    %v186 = vld [vmem:[#allocation5 + $0x218] sm:$0xff]
    %v187 = vld [vmem:[#allocation5 + $0x220] sm:$0xff]
    %v188 = vld [vmem:[#allocation5 + $0x228] sm:$0xff]
    %v189 = vld [vmem:[#allocation5 + $0x230] sm:$0xff]
    %v190 = vld [vmem:[#allocation5 + $0x238] sm:$0xff]
    %v191 = vld [vmem:[#allocation5 + $0x240] sm:$0xff]
    %v192 = vld [vmem:[#allocation5 + $0x248] sm:$0xff]
    %v193 = vld [vmem:[#allocation5 + $0x250] sm:$0xff]
    %v194 = vld [vmem:[#allocation5 + $0x258] sm:$0xff]
    %v195 = vld [vmem:[#allocation5 + $0x260] sm:$0xff]
    %v196 = vld [vmem:[#allocation5 + $0x268] sm:$0xff]
    %v197 = vld [vmem:[#allocation5 + $0x270] sm:$0xff]
    %v198 = vld [vmem:[#allocation5 + $0x278] sm:$0xff]
    %v199 = vld [vmem:[#allocation5 + $0x280] sm:$0xff]
    %v200 = vld [vmem:[#allocation5 + $0x288] sm:$0xff]
    %v201 = vld [vmem:[#allocation5 + $0x290] sm:$0xff]
    %v202 = vld [vmem:[#allocation5 + $0x298] sm:$0xff]
    %v203 = vld [vmem:[#allocation5 + $0x2a0] sm:$0xff]
    %v204 = vld [vmem:[#allocation5 + $0x2a8] sm:$0xff]
    %v205 = vld [vmem:[#allocation5 + $0x2b0] sm:$0xff]
    %v206 = vld [vmem:[#allocation5 + $0x2b8] sm:$0xff]
    %v207 = vld [vmem:[#allocation5 + $0x2c0] sm:$0xff]
    %v208 = vld [vmem:[#allocation5 + $0x2c8] sm:$0xff]
    %v209 = vld [vmem:[#allocation5 + $0x2d0] sm:$0xff]
    %v210 = vld [vmem:[#allocation5 + $0x2d8] sm:$0xff]
    %v211 = vld [vmem:[#allocation5 + $0x2e0] sm:$0xff]
    %v212 = vld [vmem:[#allocation5 + $0x2e8] sm:$0xff]
    %v213 = vld [vmem:[#allocation5 + $0x2f0] sm:$0xff]
    %v214 = vld [vmem:[#allocation5 + $0x2f8] sm:$0xff]
    %v215 = vld [vmem:[#allocation5 + $0x300] sm:$0xff]
    %v216 = vld [vmem:[#allocation5 + $0x308] sm:$0xff]
    %v217 = vld [vmem:[#allocation5 + $0x310] sm:$0xff]
    %v218 = vld [vmem:[#allocation5 + $0x318] sm:$0xff]
    %v219 = vld [vmem:[#allocation5 + $0x320] sm:$0xff]
    %v220 = vld [vmem:[#allocation5 + $0x328] sm:$0xff]
    %v221 = vld [vmem:[#allocation5 + $0x330] sm:$0xff]
    %v222 = vld [vmem:[#allocation5 + $0x338] sm:$0xff]
    %v223 = vld [vmem:[#allocation5 + $0x340] sm:$0xff]
    %v224 = vld [vmem:[#allocation5 + $0x348] sm:$0xff]
    %v225 = vld [vmem:[#allocation5 + $0x350] sm:$0xff]
    %v226 = vld [vmem:[#allocation5 + $0x358] sm:$0xff]
    %v227 = vld [vmem:[#allocation5 + $0x360] sm:$0xff]
    %v228 = vld [vmem:[#allocation5 + $0x368] sm:$0xff]
    %v229 = vld [vmem:[#allocation5 + $0x370] sm:$0xff]
    %v230 = vld [vmem:[#allocation5 + $0x378] sm:$0xff]
    %v231 = vld [vmem:[#allocation5 + $0x380] sm:$0xff]
    %v232 = vld [vmem:[#allocation5 + $0x388] sm:$0xff]
    %v233 = vld [vmem:[#allocation5 + $0x390] sm:$0xff]
    %v234 = vld [vmem:[#allocation5 + $0x398] sm:$0xff]
    %v235 = vld [vmem:[#allocation5 + $0x3a0] sm:$0xff]
    %v236 = vld [vmem:[#allocation5 + $0x3a8] sm:$0xff]
    %v237 = vld [vmem:[#allocation5 + $0x3b0] sm:$0xff]
    %v238 = vld [vmem:[#allocation5 + $0x3b8] sm:$0xff]
    %v239 = vld [vmem:[#allocation5 + $0x3c0] sm:$0xff]
    %v240 = vld [vmem:[#allocation5 + $0x3c8] sm:$0xff]
    %v241 = vld [vmem:[#allocation5 + $0x3d0] sm:$0xff]
    %v242 = vld [vmem:[#allocation5 + $0x3d8] sm:$0xff]
    %v243 = vld [vmem:[#allocation5 + $0x3e0] sm:$0xff]
    %v244 = vld [vmem:[#allocation5 + $0x3e8] sm:$0xff]
    %v245 = vld [vmem:[#allocation5 + $0x3f0] sm:$0xff]
    %v246 = vld [vmem:[#allocation5 + $0x3f8] sm:$0xff]
    %v247 = vld [vmem:[#allocation5 + $0x400] sm:$0xff]
    %v248 = vld [vmem:[#allocation5 + $0x408] sm:$0xff]
    %v249 = vld [vmem:[#allocation5 + $0x410] sm:$0xff]
    %v250 = vld [vmem:[#allocation5 + $0x418] sm:$0xff]
    %v251 = vld [vmem:[#allocation5 + $0x420] sm:$0xff]
    %v252 = vld [vmem:[#allocation5 + $0x428] sm:$0xff]
    %v253 = vld [vmem:[#allocation5 + $0x430] sm:$0xff]
    %v254 = vld [vmem:[#allocation5 + $0x438] sm:$0xff]
    %v255 = vld [vmem:[#allocation5 + $0x440] sm:$0xff]
    %v256 = vld [vmem:[#allocation5 + $0x448] sm:$0xff]
    %v257 = vld [vmem:[#allocation5 + $0x450] sm:$0xff]
    %v258 = vld [vmem:[#allocation5 + $0x458] sm:$0xff]
    %v259 = vld [vmem:[#allocation5 + $0x460] sm:$0xff]
    %v260 = vld [vmem:[#allocation5 + $0x468] sm:$0xff]
    %v261 = vld [vmem:[#allocation5 + $0x470] sm:$0xff]
    %v262 = vld [vmem:[#allocation5 + $0x478] sm:$0xff]
    %v263 = vld [vmem:[#allocation5 + $0x480] sm:$0xff]
    %v264 = vld [vmem:[#allocation5 + $0x488] sm:$0xff]
    %v265 = vld [vmem:[#allocation5 + $0x490] sm:$0xff]
    %v266 = vld [vmem:[#allocation5 + $0x498] sm:$0xff]
    %v267 = vld [vmem:[#allocation5 + $0x4a0] sm:$0xff]
    %v268 = vld [vmem:[#allocation5 + $0x4a8] sm:$0xff]
    %v269 = vld [vmem:[#allocation5 + $0x4b0] sm:$0xff]
    %v270 = vld [vmem:[#allocation5 + $0x4b8] sm:$0xff]
    %v271 = vld [vmem:[#allocation5 + $0x4c0] sm:$0xff]
    %v272 = vld [vmem:[#allocation5 + $0x4c8] sm:$0xff]
    %v273 = vld [vmem:[#allocation5 + $0x4d0] sm:$0xff]
    %v274 = vld [vmem:[#allocation5 + $0x4d8] sm:$0xff]
    %v275 = vld [vmem:[#allocation5 + $0x4e0] sm:$0xff]
    %v276 = vld [vmem:[#allocation5 + $0x4e8] sm:$0xff]
    %v277 = vld [vmem:[#allocation5 + $0x4f0] sm:$0xff]
    %v278 = vld [vmem:[#allocation5 + $0x4f8] sm:$0xff]
    %v279 = vld [vmem:[#allocation5 + $0x500] sm:$0xff]
    %v280 = vld [vmem:[#allocation5 + $0x508] sm:$0xff]
    %v281 = vld [vmem:[#allocation5 + $0x510] sm:$0xff]
    %v282 = vld [vmem:[#allocation5 + $0x518] sm:$0xff]
    %v283 = vld [vmem:[#allocation5 + $0x520] sm:$0xff]
    %v284 = vld [vmem:[#allocation5 + $0x528] sm:$0xff]
    %v285 = vld [vmem:[#allocation5 + $0x530] sm:$0xff]
    %v286 = vld [vmem:[#allocation5 + $0x538] sm:$0xff]
    %v287 = vld [vmem:[#allocation5 + $0x540] sm:$0xff]
    %v288 = vld [vmem:[#allocation5 + $0x548] sm:$0xff]
    %v289 = vld [vmem:[#allocation5 + $0x550] sm:$0xff]
    %v290 = vld [vmem:[#allocation5 + $0x558] sm:$0xff]
    %v291 = vld [vmem:[#allocation5 + $0x560] sm:$0xff]
    %v292 = vld [vmem:[#allocation5 + $0x568] sm:$0xff]
    %v293 = vld [vmem:[#allocation5 + $0x570] sm:$0xff]
    %v294 = vld [vmem:[#allocation5 + $0x578] sm:$0xff]
    %v295 = vld [vmem:[#allocation5 + $0x580] sm:$0xff]
    %v296 = vld [vmem:[#allocation5 + $0x588] sm:$0xff]
    %v297 = vld [vmem:[#allocation5 + $0x590] sm:$0xff]
    %v298 = vld [vmem:[#allocation5 + $0x598] sm:$0xff]
    %v299 = vld [vmem:[#allocation5 + $0x5a0] sm:$0xff]
    %v300 = vld [vmem:[#allocation5 + $0x5a8] sm:$0xff]
    %v301 = vld [vmem:[#allocation5 + $0x5b0] sm:$0xff]
    %v302 = vld [vmem:[#allocation5 + $0x5b8] sm:$0xff]
    %v303 = vld [vmem:[#allocation5 + $0x5c0] sm:$0xff]
    %v304 = vld [vmem:[#allocation5 + $0x5c8] sm:$0xff]
    %v305 = vld [vmem:[#allocation5 + $0x5d0] sm:$0xff]
    %v306 = vld [vmem:[#allocation5 + $0x5d8] sm:$0xff]
    %v307 = vld [vmem:[#allocation5 + $0x5e0] sm:$0xff]
    %v308 = vld [vmem:[#allocation5 + $0x5e8] sm:$0xff]
    %v309 = vld [vmem:[#allocation5 + $0x5f0] sm:$0xff]
    %v310 = vld [vmem:[#allocation5 + $0x5f8] sm:$0xff]
    %v311 = vld [vmem:[#allocation5 + $0x600] sm:$0xff]
    %v312 = vld [vmem:[#allocation5 + $0x608] sm:$0xff]
    %v313 = vld [vmem:[#allocation5 + $0x610] sm:$0xff]
    %v314 = vld [vmem:[#allocation5 + $0x618] sm:$0xff]
    %v315 = vld [vmem:[#allocation5 + $0x620] sm:$0xff]
    %v316 = vld [vmem:[#allocation5 + $0x628] sm:$0xff]
    %v317 = vld [vmem:[#allocation5 + $0x630] sm:$0xff]
    %v318 = vld [vmem:[#allocation5 + $0x638] sm:$0xff]
    %v319 = vld [vmem:[#allocation5 + $0x640] sm:$0xff]
    %v320 = vld [vmem:[#allocation5 + $0x648] sm:$0xff]
    %v321 = vld [vmem:[#allocation5 + $0x650] sm:$0xff]
    %v322 = vld [vmem:[#allocation5 + $0x658] sm:$0xff]
    %v323 = vld [vmem:[#allocation5 + $0x660] sm:$0xff]
    %v324 = vld [vmem:[#allocation5 + $0x668] sm:$0xff]
    %v325 = vld [vmem:[#allocation5 + $0x670] sm:$0xff]
    %v326 = vld [vmem:[#allocation5 + $0x678] sm:$0xff]
    %v327 = vld [vmem:[#allocation5 + $0x680] sm:$0xff]
    %v328 = vld [vmem:[#allocation5 + $0x688] sm:$0xff]
    %v329 = vld [vmem:[#allocation5 + $0x690] sm:$0xff]
    %v330 = vld [vmem:[#allocation5 + $0x698] sm:$0xff]
    %v331 = vld [vmem:[#allocation5 + $0x6a0] sm:$0xff]
    %v332 = vld [vmem:[#allocation5 + $0x6a8] sm:$0xff]
    %v333 = vld [vmem:[#allocation5 + $0x6b0] sm:$0xff]
    %v334 = vld [vmem:[#allocation5 + $0x6b8] sm:$0xff]
    %v335 = vld [vmem:[#allocation5 + $0x6c0] sm:$0xff]
    %v336 = vld [vmem:[#allocation5 + $0x6c8] sm:$0xff]
    %v337 = vld [vmem:[#allocation5 + $0x6d0] sm:$0xff]
    %v338 = vld [vmem:[#allocation5 + $0x6d8] sm:$0xff]
    %v339 = vld [vmem:[#allocation5 + $0x6e0] sm:$0xff]
    %v340 = vld [vmem:[#allocation5 + $0x6e8] sm:$0xff]
    %v341 = vld [vmem:[#allocation5 + $0x6f0] sm:$0xff]
    %v342 = vld [vmem:[#allocation5 + $0x6f8] sm:$0xff]
    %v343 = vld [vmem:[#allocation7] sm:$0xf]
    %v345 = vperm.slane %v343, 0
    %v346 = vperm.slane %v343, 1
    %v347 = vperm.slane %v343, 2
    %v348 = vperm.slane %v343, 3
    %v357 = vunpack.c.l.b16 %v115
    %v358 = vunpack.c.h.b16 %v115
    %v359 = vunpack.c.l.b16 %v116
    %v360 = vunpack.c.h.b16 %v116
    %v361 = vunpack.c.l.b16 %v117
    %v362 = vunpack.c.h.b16 %v117
    %v363 = vunpack.c.l.b16 %v118
    %v364 = vpack.c.b16 %v357, %v357
    %v365 = vpack.c.b16 %v358, %v358
    %v366 = vpack.c.b16 %v359, %v359
    %v367 = vpack.c.b16 %v360, %v360
    %v368 = vpack.c.b16 %v361, %v361
    %v369 = vpack.c.b16 %v362, %v362
    %v370 = vpack.c.b16 %v363, %v363
    %v602 = vunpack.c.l.b16 %v119
    %v603 = vunpack.c.h.b16 %v119
    %v604 = vunpack.c.l.b16 %v120
    %v605 = vunpack.c.h.b16 %v120
    %v606 = vunpack.c.l.b16 %v121
    %v607 = vunpack.c.h.b16 %v121
    %v608 = vunpack.c.l.b16 %v122
    %v609 = vunpack.c.h.b16 %v122
    %v610 = vunpack.c.l.b16 %v123
    %v611 = vunpack.c.h.b16 %v123
    %v612 = vunpack.c.l.b16 %v124
    %v613 = vunpack.c.h.b16 %v124
    %v614 = vunpack.c.l.b16 %v125
    %v615 = vunpack.c.h.b16 %v125
    %v616 = vunpack.c.l.b16 %v126
    %v617 = vunpack.c.h.b16 %v126
    %v618 = vunpack.c.l.b16 %v127
    %v619 = vunpack.c.h.b16 %v127
    %v620 = vunpack.c.l.b16 %v128
    %v621 = vunpack.c.h.b16 %v128
    %v622 = vunpack.c.l.b16 %v129
    %v623 = vunpack.c.h.b16 %v129
    %v624 = vunpack.c.l.b16 %v130
    %v625 = vunpack.c.h.b16 %v130
    %v626 = vunpack.c.l.b16 %v131
    %v627 = vunpack.c.h.b16 %v131
    %v628 = vunpack.c.l.b16 %v132
    %v629 = vunpack.c.h.b16 %v132
    %v630 = vunpack.c.l.b16 %v133
    %v631 = vunpack.c.h.b16 %v133
    %v632 = vunpack.c.l.b16 %v134
    %v633 = vunpack.c.h.b16 %v134
    %v634 = vunpack.c.l.b16 %v135
    %v635 = vunpack.c.h.b16 %v135
    %v636 = vunpack.c.l.b16 %v136
    %v637 = vunpack.c.h.b16 %v136
    %v638 = vunpack.c.l.b16 %v137
    %v639 = vunpack.c.h.b16 %v137
    %v640 = vunpack.c.l.b16 %v138
    %v641 = vunpack.c.h.b16 %v138
    %v642 = vunpack.c.l.b16 %v139
    %v643 = vunpack.c.h.b16 %v139
    %v644 = vunpack.c.l.b16 %v140
    %v645 = vunpack.c.h.b16 %v140
    %v646 = vunpack.c.l.b16 %v141
    %v647 = vunpack.c.h.b16 %v141
    %v648 = vunpack.c.l.b16 %v142
    %v649 = vunpack.c.h.b16 %v142
    %v650 = vunpack.c.l.b16 %v143
    %v651 = vunpack.c.h.b16 %v143
    %v652 = vunpack.c.l.b16 %v144
    %v653 = vunpack.c.h.b16 %v144
    %v654 = vunpack.c.l.b16 %v145
    %v655 = vunpack.c.h.b16 %v145
    %v656 = vunpack.c.l.b16 %v146
    %v657 = vunpack.c.h.b16 %v146
    %v658 = vunpack.c.l.b16 %v147
    %v659 = vunpack.c.h.b16 %v147
    %v660 = vunpack.c.l.b16 %v148
    %v661 = vunpack.c.h.b16 %v148
    %v662 = vunpack.c.l.b16 %v149
    %v663 = vunpack.c.h.b16 %v149
    %v664 = vunpack.c.l.b16 %v150
    %v665 = vunpack.c.h.b16 %v150
    %v666 = vunpack.c.l.b16 %v151
    %v667 = vunpack.c.h.b16 %v151
    %v668 = vunpack.c.l.b16 %v152
    %v669 = vunpack.c.h.b16 %v152
    %v670 = vunpack.c.l.b16 %v153
    %v671 = vunpack.c.h.b16 %v153
    %v672 = vunpack.c.l.b16 %v154
    %v673 = vunpack.c.h.b16 %v154
    %v674 = vunpack.c.l.b16 %v155
    %v675 = vunpack.c.h.b16 %v155
    %v676 = vunpack.c.l.b16 %v156
    %v677 = vunpack.c.h.b16 %v156
    %v678 = vunpack.c.l.b16 %v157
    %v679 = vunpack.c.h.b16 %v157
    %v680 = vunpack.c.l.b16 %v158
    %v681 = vunpack.c.h.b16 %v158
    %v682 = vunpack.c.l.b16 %v159
    %v683 = vunpack.c.h.b16 %v159
    %v684 = vunpack.c.l.b16 %v160
    %v685 = vunpack.c.h.b16 %v160
    %v686 = vunpack.c.l.b16 %v161
    %v687 = vunpack.c.h.b16 %v161
    %v688 = vunpack.c.l.b16 %v162
    %v689 = vunpack.c.h.b16 %v162
    %v690 = vunpack.c.l.b16 %v163
    %v691 = vunpack.c.h.b16 %v163
    %v692 = vunpack.c.l.b16 %v164
    %v693 = vunpack.c.h.b16 %v164
    %v694 = vunpack.c.l.b16 %v165
    %v695 = vunpack.c.h.b16 %v165
    %v696 = vunpack.c.l.b16 %v166
    %v697 = vunpack.c.h.b16 %v166
    %v698 = vunpack.c.l.b16 %v167
    %v699 = vunpack.c.h.b16 %v167
    %v700 = vunpack.c.l.b16 %v168
    %v701 = vunpack.c.h.b16 %v168
    %v702 = vunpack.c.l.b16 %v169
    %v703 = vunpack.c.h.b16 %v169
    %v704 = vunpack.c.l.b16 %v170
    %v705 = vunpack.c.h.b16 %v170
    %v706 = vunpack.c.l.b16 %v171
    %v707 = vunpack.c.h.b16 %v171
    %v708 = vunpack.c.l.b16 %v172
    %v709 = vunpack.c.h.b16 %v172
    %v710 = vunpack.c.l.b16 %v173
    %v711 = vunpack.c.h.b16 %v173
    %v712 = vunpack.c.l.b16 %v174
    %v713 = vunpack.c.h.b16 %v174
    %v714 = vunpack.c.l.b16 %v175
    %v715 = vunpack.c.h.b16 %v175
    %v716 = vunpack.c.l.b16 %v176
    %v717 = vunpack.c.h.b16 %v176
    %v718 = vunpack.c.l.b16 %v177
    %v719 = vunpack.c.h.b16 %v177
    %v720 = vunpack.c.l.b16 %v178
    %v721 = vunpack.c.h.b16 %v178
    %v722 = vunpack.c.l.b16 %v179
    %v723 = vunpack.c.h.b16 %v179
    %v724 = vunpack.c.l.b16 %v180
    %v725 = vunpack.c.h.b16 %v180
    %v726 = vunpack.c.l.b16 %v181
    %v727 = vunpack.c.h.b16 %v181
    %v728 = vunpack.c.l.b16 %v182
    %v729 = vunpack.c.h.b16 %v182
    %v730 = vunpack.c.l.b16 %v183
    %v731 = vunpack.c.h.b16 %v183
    %v732 = vunpack.c.l.b16 %v184
    %v733 = vunpack.c.h.b16 %v184
    %v734 = vunpack.c.l.b16 %v185
    %v735 = vunpack.c.h.b16 %v185
    %v736 = vunpack.c.l.b16 %v186
    %v737 = vunpack.c.h.b16 %v186
    %v738 = vunpack.c.l.b16 %v187
    %v739 = vunpack.c.h.b16 %v187
    %v740 = vunpack.c.l.b16 %v188
    %v741 = vunpack.c.h.b16 %v188
    %v742 = vunpack.c.l.b16 %v189
    %v743 = vunpack.c.h.b16 %v189
    %v744 = vunpack.c.l.b16 %v190
    %v745 = vunpack.c.h.b16 %v190
    %v746 = vunpack.c.l.b16 %v191
    %v747 = vunpack.c.h.b16 %v191
    %v748 = vunpack.c.l.b16 %v192
    %v749 = vunpack.c.h.b16 %v192
    %v750 = vunpack.c.l.b16 %v193
    %v751 = vunpack.c.h.b16 %v193
    %v752 = vunpack.c.l.b16 %v194
    %v753 = vunpack.c.h.b16 %v194
    %v754 = vunpack.c.l.b16 %v195
    %v755 = vunpack.c.h.b16 %v195
    %v756 = vunpack.c.l.b16 %v196
    %v757 = vunpack.c.h.b16 %v196
    %v758 = vunpack.c.l.b16 %v197
    %v759 = vunpack.c.h.b16 %v197
    %v760 = vunpack.c.l.b16 %v198
    %v761 = vunpack.c.h.b16 %v198
    %v762 = vunpack.c.l.b16 %v199
    %v763 = vunpack.c.h.b16 %v199
    %v764 = vunpack.c.l.b16 %v200
    %v765 = vunpack.c.h.b16 %v200
    %v766 = vunpack.c.l.b16 %v201
    %v767 = vunpack.c.h.b16 %v201
    %v768 = vunpack.c.l.b16 %v202
    %v769 = vunpack.c.h.b16 %v202
    %v770 = vunpack.c.l.b16 %v203
    %v771 = vunpack.c.h.b16 %v203
    %v772 = vunpack.c.l.b16 %v204
    %v773 = vunpack.c.h.b16 %v204
    %v774 = vunpack.c.l.b16 %v205
    %v775 = vunpack.c.h.b16 %v205
    %v776 = vunpack.c.l.b16 %v206
    %v777 = vunpack.c.h.b16 %v206
    %v778 = vunpack.c.l.b16 %v207
    %v779 = vunpack.c.h.b16 %v207
    %v780 = vunpack.c.l.b16 %v208
    %v781 = vunpack.c.h.b16 %v208
    %v782 = vunpack.c.l.b16 %v209
    %v783 = vunpack.c.h.b16 %v209
    %v784 = vunpack.c.l.b16 %v210
    %v785 = vunpack.c.h.b16 %v210
    %v786 = vunpack.c.l.b16 %v211
    %v787 = vunpack.c.h.b16 %v211
    %v788 = vunpack.c.l.b16 %v212
    %v789 = vunpack.c.h.b16 %v212
    %v790 = vunpack.c.l.b16 %v213
    %v791 = vunpack.c.h.b16 %v213
    %v792 = vunpack.c.l.b16 %v214
    %v793 = vunpack.c.h.b16 %v214
    %v794 = vunpack.c.l.b16 %v215
    %v795 = vunpack.c.h.b16 %v215
    %v796 = vunpack.c.l.b16 %v216
    %v797 = vunpack.c.h.b16 %v216
    %v798 = vunpack.c.l.b16 %v217
    %v799 = vunpack.c.h.b16 %v217
    %v800 = vunpack.c.l.b16 %v218
    %v801 = vunpack.c.h.b16 %v218
    %v802 = vunpack.c.l.b16 %v219
    %v803 = vunpack.c.h.b16 %v219
    %v804 = vunpack.c.l.b16 %v220
    %v805 = vunpack.c.h.b16 %v220
    %v806 = vunpack.c.l.b16 %v221
    %v807 = vunpack.c.h.b16 %v221
    %v808 = vunpack.c.l.b16 %v222
    %v809 = vunpack.c.h.b16 %v222
    %v810 = vunpack.c.l.b16 %v223
    %v811 = vunpack.c.h.b16 %v223
    %v812 = vunpack.c.l.b16 %v224
    %v813 = vunpack.c.h.b16 %v224
    %v814 = vunpack.c.l.b16 %v225
    %v815 = vunpack.c.h.b16 %v225
    %v816 = vunpack.c.l.b16 %v226
    %v817 = vunpack.c.h.b16 %v226
    %v818 = vunpack.c.l.b16 %v227
    %v819 = vunpack.c.h.b16 %v227
    %v820 = vunpack.c.l.b16 %v228
    %v821 = vunpack.c.h.b16 %v228
    %v822 = vunpack.c.l.b16 %v229
    %v823 = vunpack.c.h.b16 %v229
    %v824 = vunpack.c.l.b16 %v230
    %v825 = vunpack.c.h.b16 %v230
    %v826 = vunpack.c.l.b16 %v231
    %v827 = vunpack.c.h.b16 %v231
    %v828 = vunpack.c.l.b16 %v232
    %v829 = vunpack.c.h.b16 %v232
    %v830 = vunpack.c.l.b16 %v233
    %v831 = vunpack.c.h.b16 %v233
    %v832 = vunpack.c.l.b16 %v234
    %v833 = vunpack.c.h.b16 %v234
    %v834 = vunpack.c.l.b16 %v235
    %v835 = vunpack.c.h.b16 %v235
    %v836 = vunpack.c.l.b16 %v236
    %v837 = vunpack.c.h.b16 %v236
    %v838 = vunpack.c.l.b16 %v237
    %v839 = vunpack.c.h.b16 %v237
    %v840 = vunpack.c.l.b16 %v238
    %v841 = vunpack.c.h.b16 %v238
    %v842 = vunpack.c.l.b16 %v239
    %v843 = vunpack.c.h.b16 %v239
    %v844 = vunpack.c.l.b16 %v240
    %v845 = vunpack.c.h.b16 %v240
    %v846 = vunpack.c.l.b16 %v241
    %v847 = vunpack.c.h.b16 %v241
    %v848 = vunpack.c.l.b16 %v242
    %v849 = vunpack.c.h.b16 %v242
    %v850 = vunpack.c.l.b16 %v243
    %v851 = vunpack.c.h.b16 %v243
    %v852 = vunpack.c.l.b16 %v244
    %v853 = vunpack.c.h.b16 %v244
    %v854 = vunpack.c.l.b16 %v245
    %v855 = vunpack.c.h.b16 %v245
    %v856 = vunpack.c.l.b16 %v246
    %v857 = vunpack.c.h.b16 %v246
    %v858 = vunpack.c.l.b16 %v247
    %v859 = vunpack.c.h.b16 %v247
    %v860 = vunpack.c.l.b16 %v248
    %v861 = vunpack.c.h.b16 %v248
    %v862 = vunpack.c.l.b16 %v249
    %v863 = vunpack.c.h.b16 %v249
    %v864 = vunpack.c.l.b16 %v250
    %v865 = vunpack.c.h.b16 %v250
    %v866 = vunpack.c.l.b16 %v251
    %v867 = vunpack.c.h.b16 %v251
    %v868 = vunpack.c.l.b16 %v252
    %v869 = vunpack.c.h.b16 %v252
    %v870 = vunpack.c.l.b16 %v253
    %v871 = vunpack.c.h.b16 %v253
    %v872 = vunpack.c.l.b16 %v254
    %v873 = vunpack.c.h.b16 %v254
    %v874 = vunpack.c.l.b16 %v255
    %v875 = vunpack.c.h.b16 %v255
    %v876 = vunpack.c.l.b16 %v256
    %v877 = vunpack.c.h.b16 %v256
    %v878 = vunpack.c.l.b16 %v257
    %v879 = vunpack.c.h.b16 %v257
    %v880 = vunpack.c.l.b16 %v258
    %v881 = vunpack.c.h.b16 %v258
    %v882 = vunpack.c.l.b16 %v259
    %v883 = vunpack.c.h.b16 %v259
    %v884 = vunpack.c.l.b16 %v260
    %v885 = vunpack.c.h.b16 %v260
    %v886 = vunpack.c.l.b16 %v261
    %v887 = vunpack.c.h.b16 %v261
    %v888 = vunpack.c.l.b16 %v262
    %v889 = vunpack.c.h.b16 %v262
    %v890 = vunpack.c.l.b16 %v263
    %v891 = vunpack.c.h.b16 %v263
    %v892 = vunpack.c.l.b16 %v264
    %v893 = vunpack.c.h.b16 %v264
    %v894 = vunpack.c.l.b16 %v265
    %v895 = vunpack.c.h.b16 %v265
    %v896 = vunpack.c.l.b16 %v266
    %v897 = vunpack.c.h.b16 %v266
    %v898 = vunpack.c.l.b16 %v267
    %v899 = vunpack.c.h.b16 %v267
    %v900 = vunpack.c.l.b16 %v268
    %v901 = vunpack.c.h.b16 %v268
    %v902 = vunpack.c.l.b16 %v269
    %v903 = vunpack.c.h.b16 %v269
    %v904 = vunpack.c.l.b16 %v270
    %v905 = vunpack.c.h.b16 %v270
    %v906 = vunpack.c.l.b16 %v271
    %v907 = vunpack.c.h.b16 %v271
    %v908 = vunpack.c.l.b16 %v272
    %v909 = vunpack.c.h.b16 %v272
    %v910 = vunpack.c.l.b16 %v273
    %v911 = vunpack.c.h.b16 %v273
    %v912 = vunpack.c.l.b16 %v274
    %v913 = vunpack.c.h.b16 %v274
    %v914 = vunpack.c.l.b16 %v275
    %v915 = vunpack.c.h.b16 %v275
    %v916 = vunpack.c.l.b16 %v276
    %v917 = vunpack.c.h.b16 %v276
    %v918 = vunpack.c.l.b16 %v277
    %v919 = vunpack.c.h.b16 %v277
    %v920 = vunpack.c.l.b16 %v278
    %v921 = vunpack.c.h.b16 %v278
    %v922 = vunpack.c.l.b16 %v279
    %v923 = vunpack.c.h.b16 %v279
    %v924 = vunpack.c.l.b16 %v280
    %v925 = vunpack.c.h.b16 %v280
    %v926 = vunpack.c.l.b16 %v281
    %v927 = vunpack.c.h.b16 %v281
    %v928 = vunpack.c.l.b16 %v282
    %v929 = vunpack.c.h.b16 %v282
    %v930 = vunpack.c.l.b16 %v283
    %v931 = vunpack.c.h.b16 %v283
    %v932 = vunpack.c.l.b16 %v284
    %v933 = vunpack.c.h.b16 %v284
    %v934 = vunpack.c.l.b16 %v285
    %v935 = vunpack.c.h.b16 %v285
    %v936 = vunpack.c.l.b16 %v286
    %v937 = vunpack.c.h.b16 %v286
    %v938 = vunpack.c.l.b16 %v287
    %v939 = vunpack.c.h.b16 %v287
    %v940 = vunpack.c.l.b16 %v288
    %v941 = vunpack.c.h.b16 %v288
    %v942 = vunpack.c.l.b16 %v289
    %v943 = vunpack.c.h.b16 %v289
    %v944 = vunpack.c.l.b16 %v290
    %v945 = vunpack.c.h.b16 %v290
    %v946 = vunpack.c.l.b16 %v291
    %v947 = vunpack.c.h.b16 %v291
    %v948 = vunpack.c.l.b16 %v292
    %v949 = vunpack.c.h.b16 %v292
    %v950 = vunpack.c.l.b16 %v293
    %v951 = vunpack.c.h.b16 %v293
    %v952 = vunpack.c.l.b16 %v294
    %v953 = vunpack.c.h.b16 %v294
    %v954 = vunpack.c.l.b16 %v295
    %v955 = vunpack.c.h.b16 %v295
    %v956 = vunpack.c.l.b16 %v296
    %v957 = vunpack.c.h.b16 %v296
    %v958 = vunpack.c.l.b16 %v297
    %v959 = vunpack.c.h.b16 %v297
    %v960 = vunpack.c.l.b16 %v298
    %v961 = vunpack.c.h.b16 %v298
    %v962 = vunpack.c.l.b16 %v299
    %v963 = vunpack.c.h.b16 %v299
    %v964 = vunpack.c.l.b16 %v300
    %v965 = vunpack.c.h.b16 %v300
    %v966 = vunpack.c.l.b16 %v301
    %v967 = vunpack.c.h.b16 %v301
    %v968 = vunpack.c.l.b16 %v302
    %v969 = vunpack.c.h.b16 %v302
    %v970 = vunpack.c.l.b16 %v303
    %v971 = vunpack.c.h.b16 %v303
    %v972 = vunpack.c.l.b16 %v304
    %v973 = vunpack.c.h.b16 %v304
    %v974 = vunpack.c.l.b16 %v305
    %v975 = vunpack.c.h.b16 %v305
    %v976 = vunpack.c.l.b16 %v306
    %v977 = vunpack.c.h.b16 %v306
    %v978 = vunpack.c.l.b16 %v307
    %v979 = vunpack.c.h.b16 %v307
    %v980 = vunpack.c.l.b16 %v308
    %v981 = vunpack.c.h.b16 %v308
    %v982 = vunpack.c.l.b16 %v309
    %v983 = vunpack.c.h.b16 %v309
    %v984 = vunpack.c.l.b16 %v310
    %v985 = vunpack.c.h.b16 %v310
    %v986 = vunpack.c.l.b16 %v311
    %v987 = vunpack.c.h.b16 %v311
    %v988 = vunpack.c.l.b16 %v312
    %v989 = vunpack.c.h.b16 %v312
    %v990 = vunpack.c.l.b16 %v313
    %v991 = vunpack.c.h.b16 %v313
    %v992 = vunpack.c.l.b16 %v314
    %v993 = vunpack.c.h.b16 %v314
    %v994 = vunpack.c.l.b16 %v315
    %v995 = vunpack.c.h.b16 %v315
    %v996 = vunpack.c.l.b16 %v316
    %v997 = vunpack.c.h.b16 %v316
    %v998 = vunpack.c.l.b16 %v317
    %v999 = vunpack.c.h.b16 %v317
    %v1000 = vunpack.c.l.b16 %v318
    %v1001 = vunpack.c.h.b16 %v318
    %v1002 = vunpack.c.l.b16 %v319
    %v1003 = vunpack.c.h.b16 %v319
    %v1004 = vunpack.c.l.b16 %v320
    %v1005 = vunpack.c.h.b16 %v320
    %v1006 = vunpack.c.l.b16 %v321
    %v1007 = vunpack.c.h.b16 %v321
    %v1008 = vunpack.c.l.b16 %v322
    %v1009 = vunpack.c.h.b16 %v322
    %v1010 = vunpack.c.l.b16 %v323
    %v1011 = vunpack.c.h.b16 %v323
    %v1012 = vunpack.c.l.b16 %v324
    %v1013 = vunpack.c.h.b16 %v324
    %v1014 = vunpack.c.l.b16 %v325
    %v1015 = vunpack.c.h.b16 %v325
    %v1016 = vunpack.c.l.b16 %v326
    %v1017 = vunpack.c.h.b16 %v326
    %v1018 = vunpack.c.l.b16 %v327
    %v1019 = vunpack.c.h.b16 %v327
    %v1020 = vunpack.c.l.b16 %v328
    %v1021 = vunpack.c.h.b16 %v328
    %v1022 = vunpack.c.l.b16 %v329
    %v1023 = vunpack.c.h.b16 %v329
    %v1024 = vunpack.c.l.b16 %v330
    %v1025 = vunpack.c.h.b16 %v330
    %v1026 = vunpack.c.l.b16 %v331
    %v1027 = vunpack.c.h.b16 %v331
    %v1028 = vunpack.c.l.b16 %v332
    %v1029 = vunpack.c.h.b16 %v332
    %v1030 = vunpack.c.l.b16 %v333
    %v1031 = vunpack.c.h.b16 %v333
    %v1032 = vunpack.c.l.b16 %v334
    %v1033 = vunpack.c.h.b16 %v334
    %v1034 = vunpack.c.l.b16 %v335
    %v1035 = vunpack.c.h.b16 %v335
    %v1036 = vunpack.c.l.b16 %v336
    %v1037 = vunpack.c.h.b16 %v336
    %v1038 = vunpack.c.l.b16 %v337
    %v1039 = vunpack.c.h.b16 %v337
    %v1040 = vunpack.c.l.b16 %v338
    %v1041 = vunpack.c.h.b16 %v338
    %v1042 = vunpack.c.l.b16 %v339
    %v1043 = vunpack.c.h.b16 %v339
    %v1044 = vunpack.c.l.b16 %v340
    %v1045 = vunpack.c.h.b16 %v340
    %v1046 = vunpack.c.l.b16 %v341
    %v1047 = vunpack.c.h.b16 %v341
    %v1048 = vunpack.c.l.b16 %v342
    %v1049 = vunpack.c.h.b16 %v342
    %v1050 = vpack.c.b16 %v606, %v602
    %v1051 = vpack.c.b16 %v607, %v603
    %v1052 = vpack.c.b16 %v608, %v604
    %v1053 = vpack.c.b16 %v609, %v605
    %v1054 = vpack.c.b16 %v614, %v610
    %v1055 = vpack.c.b16 %v615, %v611
    %v1056 = vpack.c.b16 %v616, %v612
    %v1057 = vpack.c.b16 %v617, %v613
    %v1058 = vpack.c.b16 %v622, %v618
    %v1059 = vpack.c.b16 %v623, %v619
    %v1060 = vpack.c.b16 %v624, %v620
    %v1061 = vpack.c.b16 %v625, %v621
    %v1062 = vpack.c.b16 %v630, %v626
    %v1063 = vpack.c.b16 %v631, %v627
    %v1064 = vpack.c.b16 %v632, %v628
    %v1065 = vpack.c.b16 %v633, %v629
    %v1066 = vpack.c.b16 %v638, %v634
    %v1067 = vpack.c.b16 %v639, %v635
    %v1068 = vpack.c.b16 %v640, %v636
    %v1069 = vpack.c.b16 %v641, %v637
    %v1070 = vpack.c.b16 %v646, %v642
    %v1071 = vpack.c.b16 %v647, %v643
    %v1072 = vpack.c.b16 %v648, %v644
    %v1073 = vpack.c.b16 %v649, %v645
    %v1074 = vpack.c.b16 %v654, %v650
    %v1075 = vpack.c.b16 %v655, %v651
    %v1076 = vpack.c.b16 %v656, %v652
    %v1077 = vpack.c.b16 %v657, %v653
    %v1078 = vpack.c.b16 %v662, %v658
    %v1079 = vpack.c.b16 %v663, %v659
    %v1080 = vpack.c.b16 %v664, %v660
    %v1081 = vpack.c.b16 %v665, %v661
    %v1082 = vpack.c.b16 %v670, %v666
    %v1083 = vpack.c.b16 %v671, %v667
    %v1084 = vpack.c.b16 %v672, %v668
    %v1085 = vpack.c.b16 %v673, %v669
    %v1086 = vpack.c.b16 %v678, %v674
    %v1087 = vpack.c.b16 %v679, %v675
    %v1088 = vpack.c.b16 %v680, %v676
    %v1089 = vpack.c.b16 %v681, %v677
    %v1090 = vpack.c.b16 %v686, %v682
    %v1091 = vpack.c.b16 %v687, %v683
    %v1092 = vpack.c.b16 %v688, %v684
    %v1093 = vpack.c.b16 %v689, %v685
    %v1094 = vpack.c.b16 %v694, %v690
    %v1095 = vpack.c.b16 %v695, %v691
    %v1096 = vpack.c.b16 %v696, %v692
    %v1097 = vpack.c.b16 %v697, %v693
    %v1098 = vpack.c.b16 %v702, %v698
    %v1099 = vpack.c.b16 %v703, %v699
    %v1100 = vpack.c.b16 %v704, %v700
    %v1101 = vpack.c.b16 %v705, %v701
    %v1102 = vpack.c.b16 %v710, %v706
    %v1103 = vpack.c.b16 %v711, %v707
    %v1104 = vpack.c.b16 %v712, %v708
    %v1105 = vpack.c.b16 %v713, %v709
    %v1106 = vpack.c.b16 %v718, %v714
    %v1107 = vpack.c.b16 %v719, %v715
    %v1108 = vpack.c.b16 %v720, %v716
    %v1109 = vpack.c.b16 %v721, %v717
    %v1110 = vpack.c.b16 %v726, %v722
    %v1111 = vpack.c.b16 %v727, %v723
    %v1112 = vpack.c.b16 %v728, %v724
    %v1113 = vpack.c.b16 %v729, %v725
    %v1114 = vpack.c.b16 %v734, %v730
    %v1115 = vpack.c.b16 %v735, %v731
    %v1116 = vpack.c.b16 %v736, %v732
    %v1117 = vpack.c.b16 %v737, %v733
    %v1118 = vpack.c.b16 %v742, %v738
    %v1119 = vpack.c.b16 %v743, %v739
    %v1120 = vpack.c.b16 %v744, %v740
    %v1121 = vpack.c.b16 %v745, %v741
    %v1122 = vpack.c.b16 %v750, %v746
    %v1123 = vpack.c.b16 %v751, %v747
    %v1124 = vpack.c.b16 %v752, %v748
    %v1125 = vpack.c.b16 %v753, %v749
    %v1126 = vpack.c.b16 %v758, %v754
    %v1127 = vpack.c.b16 %v759, %v755
    %v1128 = vpack.c.b16 %v760, %v756
    %v1129 = vpack.c.b16 %v761, %v757
    %v1130 = vpack.c.b16 %v766, %v762
    %v1131 = vpack.c.b16 %v767, %v763
    %v1132 = vpack.c.b16 %v768, %v764
    %v1133 = vpack.c.b16 %v769, %v765
    %v1134 = vpack.c.b16 %v774, %v770
    %v1135 = vpack.c.b16 %v775, %v771
    %v1136 = vpack.c.b16 %v776, %v772
    %v1137 = vpack.c.b16 %v777, %v773
    %v1138 = vpack.c.b16 %v782, %v778
    %v1139 = vpack.c.b16 %v783, %v779
    %v1140 = vpack.c.b16 %v784, %v780
    %v1141 = vpack.c.b16 %v785, %v781
    %v1142 = vpack.c.b16 %v790, %v786
    %v1143 = vpack.c.b16 %v791, %v787
    %v1144 = vpack.c.b16 %v792, %v788
    %v1145 = vpack.c.b16 %v793, %v789
    %v1146 = vpack.c.b16 %v798, %v794
    %v1147 = vpack.c.b16 %v799, %v795
    %v1148 = vpack.c.b16 %v800, %v796
    %v1149 = vpack.c.b16 %v801, %v797
    %v1150 = vpack.c.b16 %v806, %v802
    %v1151 = vpack.c.b16 %v807, %v803
    %v1152 = vpack.c.b16 %v808, %v804
    %v1153 = vpack.c.b16 %v809, %v805
    %v1154 = vpack.c.b16 %v814, %v810
    %v1155 = vpack.c.b16 %v815, %v811
    %v1156 = vpack.c.b16 %v816, %v812
    %v1157 = vpack.c.b16 %v817, %v813
    %v1158 = vpack.c.b16 %v822, %v818
    %v1159 = vpack.c.b16 %v823, %v819
    %v1160 = vpack.c.b16 %v824, %v820
    %v1161 = vpack.c.b16 %v825, %v821
    %v1162 = vpack.c.b16 %v830, %v826
    %v1163 = vpack.c.b16 %v831, %v827
    %v1164 = vpack.c.b16 %v832, %v828
    %v1165 = vpack.c.b16 %v833, %v829
    %v1166 = vpack.c.b16 %v838, %v834
    %v1167 = vpack.c.b16 %v839, %v835
    %v1168 = vpack.c.b16 %v840, %v836
    %v1169 = vpack.c.b16 %v841, %v837
    %v1170 = vpack.c.b16 %v846, %v842
    %v1171 = vpack.c.b16 %v847, %v843
    %v1172 = vpack.c.b16 %v848, %v844
    %v1173 = vpack.c.b16 %v849, %v845
    %v1174 = vpack.c.b16 %v854, %v850
    %v1175 = vpack.c.b16 %v855, %v851
    %v1176 = vpack.c.b16 %v856, %v852
    %v1177 = vpack.c.b16 %v857, %v853
    %v1178 = vpack.c.b16 %v862, %v858
    %v1179 = vpack.c.b16 %v863, %v859
    %v1180 = vpack.c.b16 %v864, %v860
    %v1181 = vpack.c.b16 %v865, %v861
    %v1182 = vpack.c.b16 %v870, %v866
    %v1183 = vpack.c.b16 %v871, %v867
    %v1184 = vpack.c.b16 %v872, %v868
    %v1185 = vpack.c.b16 %v873, %v869
    %v1186 = vpack.c.b16 %v878, %v874
    %v1187 = vpack.c.b16 %v879, %v875
    %v1188 = vpack.c.b16 %v880, %v876
    %v1189 = vpack.c.b16 %v881, %v877
    %v1190 = vpack.c.b16 %v886, %v882
    %v1191 = vpack.c.b16 %v887, %v883
    %v1192 = vpack.c.b16 %v888, %v884
    %v1193 = vpack.c.b16 %v889, %v885
    %v1194 = vpack.c.b16 %v894, %v890
    %v1195 = vpack.c.b16 %v895, %v891
    %v1196 = vpack.c.b16 %v896, %v892
    %v1197 = vpack.c.b16 %v897, %v893
    %v1198 = vpack.c.b16 %v902, %v898
    %v1199 = vpack.c.b16 %v903, %v899
    %v1200 = vpack.c.b16 %v904, %v900
    %v1201 = vpack.c.b16 %v905, %v901
    %v1202 = vpack.c.b16 %v910, %v906
    %v1203 = vpack.c.b16 %v911, %v907
    %v1204 = vpack.c.b16 %v912, %v908
    %v1205 = vpack.c.b16 %v913, %v909
    %v1206 = vpack.c.b16 %v918, %v914
    %v1207 = vpack.c.b16 %v919, %v915
    %v1208 = vpack.c.b16 %v920, %v916
    %v1209 = vpack.c.b16 %v921, %v917
    %v1210 = vpack.c.b16 %v926, %v922
    %v1211 = vpack.c.b16 %v927, %v923
    %v1212 = vpack.c.b16 %v928, %v924
    %v1213 = vpack.c.b16 %v929, %v925
    %v1214 = vpack.c.b16 %v934, %v930
    %v1215 = vpack.c.b16 %v935, %v931
    %v1216 = vpack.c.b16 %v936, %v932
    %v1217 = vpack.c.b16 %v937, %v933
    %v1218 = vpack.c.b16 %v942, %v938
    %v1219 = vpack.c.b16 %v943, %v939
    %v1220 = vpack.c.b16 %v944, %v940
    %v1221 = vpack.c.b16 %v945, %v941
    %v1222 = vpack.c.b16 %v950, %v946
    %v1223 = vpack.c.b16 %v951, %v947
    %v1224 = vpack.c.b16 %v952, %v948
    %v1225 = vpack.c.b16 %v953, %v949
    %v1226 = vpack.c.b16 %v958, %v954
    %v1227 = vpack.c.b16 %v959, %v955
    %v1228 = vpack.c.b16 %v960, %v956
    %v1229 = vpack.c.b16 %v961, %v957
    %v1230 = vpack.c.b16 %v966, %v962
    %v1231 = vpack.c.b16 %v967, %v963
    %v1232 = vpack.c.b16 %v968, %v964
    %v1233 = vpack.c.b16 %v969, %v965
    %v1234 = vpack.c.b16 %v974, %v970
    %v1235 = vpack.c.b16 %v975, %v971
    %v1236 = vpack.c.b16 %v976, %v972
    %v1237 = vpack.c.b16 %v977, %v973
    %v1238 = vpack.c.b16 %v982, %v978
    %v1239 = vpack.c.b16 %v983, %v979
    %v1240 = vpack.c.b16 %v984, %v980
    %v1241 = vpack.c.b16 %v985, %v981
    %v1242 = vpack.c.b16 %v990, %v986
    %v1243 = vpack.c.b16 %v991, %v987
    %v1244 = vpack.c.b16 %v992, %v988
    %v1245 = vpack.c.b16 %v993, %v989
    %v1246 = vpack.c.b16 %v998, %v994
    %v1247 = vpack.c.b16 %v999, %v995
    %v1248 = vpack.c.b16 %v1000, %v996
    %v1249 = vpack.c.b16 %v1001, %v997
    %v1250 = vpack.c.b16 %v1006, %v1002
    %v1251 = vpack.c.b16 %v1007, %v1003
    %v1252 = vpack.c.b16 %v1008, %v1004
    %v1253 = vpack.c.b16 %v1009, %v1005
    %v1254 = vpack.c.b16 %v1014, %v1010
    %v1255 = vpack.c.b16 %v1015, %v1011
    %v1256 = vpack.c.b16 %v1016, %v1012
    %v1257 = vpack.c.b16 %v1017, %v1013
    %v1258 = vpack.c.b16 %v1022, %v1018
    %v1259 = vpack.c.b16 %v1023, %v1019
    %v1260 = vpack.c.b16 %v1024, %v1020
    %v1261 = vpack.c.b16 %v1025, %v1021
    %v1262 = vpack.c.b16 %v1030, %v1026
    %v1263 = vpack.c.b16 %v1031, %v1027
    %v1264 = vpack.c.b16 %v1032, %v1028
    %v1265 = vpack.c.b16 %v1033, %v1029
    %v1266 = vpack.c.b16 %v1038, %v1034
    %v1267 = vpack.c.b16 %v1039, %v1035
    %v1268 = vpack.c.b16 %v1040, %v1036
    %v1269 = vpack.c.b16 %v1041, %v1037
    %v1270 = vpack.c.b16 %v1046, %v1042
    %v1271 = vpack.c.b16 %v1047, %v1043
    %v1272 = vpack.c.b16 %v1048, %v1044
    %v1273 = vpack.c.b16 %v1049, %v1045
    %1498 = vmatpush.bf16.msra.mxu0 %v1078
    %1499 = vmatpush.bf16.msra.mxu0 %v1074
    %1500 = vmatpush.bf16.msra.mxu0 %v1070
    %1501 = vmatpush.bf16.msra.mxu0 %v1066
    %1502 = vmatpush.bf16.msra.mxu0 %v1062
    %1503 = vmatpush.bf16.msra.mxu0 %v1058
    %1504 = vmatpush.bf16.msra.mxu0 %v1054
    %1505 = vmatpush.bf16.msra.mxu0 %v1050
    %1506 = vmatmul.bf16.gmra.mxu0 %v364
    %v1507 = vpop.f32.mrf.mxu0
    %v1508 = vadd.f32 %v345, %v1507
    %v1509 = vpop.f32.mrf.mxu0
    %1510 = vdwg.mxu0
    %1511 = vmatpush.bf16.msra.mxu0 %v1110
    %1512 = vmatpush.bf16.msra.mxu0 %v1106
    %1513 = vmatpush.bf16.msra.mxu0 %v1102
    %1514 = vmatpush.bf16.msra.mxu0 %v1098
    %1515 = vmatpush.bf16.msra.mxu0 %v1094
    %1516 = vmatpush.bf16.msra.mxu0 %v1090
    %1517 = vmatpush.bf16.msra.mxu0 %v1086
    %1518 = vmatpush.bf16.msra.mxu0 %v1082
    %1519 = vmatmul.bf16.gmra.mxu0 %v365
    %v1520 = vpop.f32.mrf.mxu0
    %v1521 = vadd.f32 %v1508, %v1520
    %v1522 = vpop.f32.mrf.mxu0
    %1523 = vdwg.mxu0
    %1524 = vmatpush.bf16.msra.mxu0 %v1142
    %1525 = vmatpush.bf16.msra.mxu0 %v1138
    %1526 = vmatpush.bf16.msra.mxu0 %v1134
    %1527 = vmatpush.bf16.msra.mxu0 %v1130
    %1528 = vmatpush.bf16.msra.mxu0 %v1126
    %1529 = vmatpush.bf16.msra.mxu0 %v1122
    %1530 = vmatpush.bf16.msra.mxu0 %v1118
    %1531 = vmatpush.bf16.msra.mxu0 %v1114
    %1532 = vmatmul.bf16.gmra.mxu0 %v366
    %v1533 = vpop.f32.mrf.mxu0
    %v1534 = vadd.f32 %v1521, %v1533
    %v1535 = vpop.f32.mrf.mxu0
    %1536 = vdwg.mxu0
    %1537 = vmatpush.bf16.msra.mxu0 %v1174
    %1538 = vmatpush.bf16.msra.mxu0 %v1170
    %1539 = vmatpush.bf16.msra.mxu0 %v1166
    %1540 = vmatpush.bf16.msra.mxu0 %v1162
    %1541 = vmatpush.bf16.msra.mxu0 %v1158
    %1542 = vmatpush.bf16.msra.mxu0 %v1154
    %1543 = vmatpush.bf16.msra.mxu0 %v1150
    %1544 = vmatpush.bf16.msra.mxu0 %v1146
    %1545 = vmatmul.bf16.gmra.mxu0 %v367
    %v1546 = vpop.f32.mrf.mxu0
    %v1547 = vadd.f32 %v1534, %v1546
    %v1548 = vpop.f32.mrf.mxu0
    %1549 = vdwg.mxu0
    %1550 = vmatpush.bf16.msra.mxu0 %v1206
    %1551 = vmatpush.bf16.msra.mxu0 %v1202
    %1552 = vmatpush.bf16.msra.mxu0 %v1198
    %1553 = vmatpush.bf16.msra.mxu0 %v1194
    %1554 = vmatpush.bf16.msra.mxu0 %v1190
    %1555 = vmatpush.bf16.msra.mxu0 %v1186
    %1556 = vmatpush.bf16.msra.mxu0 %v1182
    %1557 = vmatpush.bf16.msra.mxu0 %v1178
    %1558 = vmatmul.bf16.gmra.mxu0 %v368
    %v1559 = vpop.f32.mrf.mxu0
    %v1560 = vadd.f32 %v1547, %v1559
    %v1561 = vpop.f32.mrf.mxu0
    %1562 = vdwg.mxu0
    %1563 = vmatpush.bf16.msra.mxu0 %v1238
    %1564 = vmatpush.bf16.msra.mxu0 %v1234
    %1565 = vmatpush.bf16.msra.mxu0 %v1230
    %1566 = vmatpush.bf16.msra.mxu0 %v1226
    %1567 = vmatpush.bf16.msra.mxu0 %v1222
    %1568 = vmatpush.bf16.msra.mxu0 %v1218
    %1569 = vmatpush.bf16.msra.mxu0 %v1214
    %1570 = vmatpush.bf16.msra.mxu0 %v1210
    %1571 = vmatmul.bf16.gmra.mxu0 %v369
    %v1572 = vpop.f32.mrf.mxu0
    %v1573 = vadd.f32 %v1560, %v1572
    %v1574 = vpop.f32.mrf.mxu0
    %1575 = vdwg.mxu0
    %1576 = vmatpush.bf16.msra.mxu0 %v1270
    %1577 = vmatpush.bf16.msra.mxu0 %v1266
    %1578 = vmatpush.bf16.msra.mxu0 %v1262
    %1579 = vmatpush.bf16.msra.mxu0 %v1258
    %1580 = vmatpush.bf16.msra.mxu0 %v1254
    %1581 = vmatpush.bf16.msra.mxu0 %v1250
    %1582 = vmatpush.bf16.msra.mxu0 %v1246
    %1583 = vmatpush.bf16.msra.mxu0 %v1242
    %1584 = vmatmul.bf16.gmra.mxu0 %v370
    %v1585 = vpop.f32.mrf.mxu0
    %v1586 = vadd.f32 %v1573, %v1585
    %v1587 = vpop.f32.mrf.mxu0
    %1588 = vdwg.mxu0
    %1589 = vmatpush.bf16.msra.mxu0 %v1079
    %1590 = vmatpush.bf16.msra.mxu0 %v1075
    %1591 = vmatpush.bf16.msra.mxu0 %v1071
    %1592 = vmatpush.bf16.msra.mxu0 %v1067
    %1593 = vmatpush.bf16.msra.mxu0 %v1063
    %1594 = vmatpush.bf16.msra.mxu0 %v1059
    %1595 = vmatpush.bf16.msra.mxu0 %v1055
    %1596 = vmatpush.bf16.msra.mxu0 %v1051
    %1597 = vmatmul.bf16.gmra.mxu0 %v364
    %v1598 = vpop.f32.mrf.mxu0
    %v1599 = vadd.f32 %v346, %v1598
    %v1600 = vpop.f32.mrf.mxu0
    %1601 = vdwg.mxu0
    %1602 = vmatpush.bf16.msra.mxu0 %v1111
    %1603 = vmatpush.bf16.msra.mxu0 %v1107
    %1604 = vmatpush.bf16.msra.mxu0 %v1103
    %1605 = vmatpush.bf16.msra.mxu0 %v1099
    %1606 = vmatpush.bf16.msra.mxu0 %v1095
    %1607 = vmatpush.bf16.msra.mxu0 %v1091
    %1608 = vmatpush.bf16.msra.mxu0 %v1087
    %1609 = vmatpush.bf16.msra.mxu0 %v1083
    %1610 = vmatmul.bf16.gmra.mxu0 %v365
    %v1611 = vpop.f32.mrf.mxu0
    %v1612 = vadd.f32 %v1599, %v1611
    %v1613 = vpop.f32.mrf.mxu0
    %1614 = vdwg.mxu0
    %1615 = vmatpush.bf16.msra.mxu0 %v1143
    %1616 = vmatpush.bf16.msra.mxu0 %v1139
    %1617 = vmatpush.bf16.msra.mxu0 %v1135
    %1618 = vmatpush.bf16.msra.mxu0 %v1131
    %1619 = vmatpush.bf16.msra.mxu0 %v1127
    %1620 = vmatpush.bf16.msra.mxu0 %v1123
    %1621 = vmatpush.bf16.msra.mxu0 %v1119
    %1622 = vmatpush.bf16.msra.mxu0 %v1115
    %1623 = vmatmul.bf16.gmra.mxu0 %v366
    %v1624 = vpop.f32.mrf.mxu0
    %v1625 = vadd.f32 %v1612, %v1624
    %v1626 = vpop.f32.mrf.mxu0
    %1627 = vdwg.mxu0
    %1628 = vmatpush.bf16.msra.mxu0 %v1175
    %1629 = vmatpush.bf16.msra.mxu0 %v1171
    %1630 = vmatpush.bf16.msra.mxu0 %v1167
    %1631 = vmatpush.bf16.msra.mxu0 %v1163
    %1632 = vmatpush.bf16.msra.mxu0 %v1159
    %1633 = vmatpush.bf16.msra.mxu0 %v1155
    %1634 = vmatpush.bf16.msra.mxu0 %v1151
    %1635 = vmatpush.bf16.msra.mxu0 %v1147
    %1636 = vmatmul.bf16.gmra.mxu0 %v367
    %v1637 = vpop.f32.mrf.mxu0
    %v1638 = vadd.f32 %v1625, %v1637
    %v1639 = vpop.f32.mrf.mxu0
    %1640 = vdwg.mxu0
    %1641 = vmatpush.bf16.msra.mxu0 %v1207
    %1642 = vmatpush.bf16.msra.mxu0 %v1203
    %1643 = vmatpush.bf16.msra.mxu0 %v1199
    %1644 = vmatpush.bf16.msra.mxu0 %v1195
    %1645 = vmatpush.bf16.msra.mxu0 %v1191
    %1646 = vmatpush.bf16.msra.mxu0 %v1187
    %1647 = vmatpush.bf16.msra.mxu0 %v1183
    %1648 = vmatpush.bf16.msra.mxu0 %v1179
    %1649 = vmatmul.bf16.gmra.mxu0 %v368
    %v1650 = vpop.f32.mrf.mxu0
    %v1651 = vadd.f32 %v1638, %v1650
    %v1652 = vpop.f32.mrf.mxu0
    %1653 = vdwg.mxu0
    %1654 = vmatpush.bf16.msra.mxu0 %v1239
    %1655 = vmatpush.bf16.msra.mxu0 %v1235
    %1656 = vmatpush.bf16.msra.mxu0 %v1231
    %1657 = vmatpush.bf16.msra.mxu0 %v1227
    %1658 = vmatpush.bf16.msra.mxu0 %v1223
    %1659 = vmatpush.bf16.msra.mxu0 %v1219
    %1660 = vmatpush.bf16.msra.mxu0 %v1215
    %1661 = vmatpush.bf16.msra.mxu0 %v1211
    %1662 = vmatmul.bf16.gmra.mxu0 %v369
    %v1663 = vpop.f32.mrf.mxu0
    %v1664 = vadd.f32 %v1651, %v1663
    %v1665 = vpop.f32.mrf.mxu0
    %1666 = vdwg.mxu0
    %1667 = vmatpush.bf16.msra.mxu0 %v1271
    %1668 = vmatpush.bf16.msra.mxu0 %v1267
    %1669 = vmatpush.bf16.msra.mxu0 %v1263
    %1670 = vmatpush.bf16.msra.mxu0 %v1259
    %1671 = vmatpush.bf16.msra.mxu0 %v1255
    %1672 = vmatpush.bf16.msra.mxu0 %v1251
    %1673 = vmatpush.bf16.msra.mxu0 %v1247
    %1674 = vmatpush.bf16.msra.mxu0 %v1243
    %1675 = vmatmul.bf16.gmra.mxu0 %v370
    %v1676 = vpop.f32.mrf.mxu0
    %v1677 = vadd.f32 %v1664, %v1676
    %v1678 = vpop.f32.mrf.mxu0
    %1679 = vdwg.mxu0
    %1680 = vmatpush.bf16.msra.mxu0 %v1080
    %1681 = vmatpush.bf16.msra.mxu0 %v1076
    %1682 = vmatpush.bf16.msra.mxu0 %v1072
    %1683 = vmatpush.bf16.msra.mxu0 %v1068
    %1684 = vmatpush.bf16.msra.mxu0 %v1064
    %1685 = vmatpush.bf16.msra.mxu0 %v1060
    %1686 = vmatpush.bf16.msra.mxu0 %v1056
    %1687 = vmatpush.bf16.msra.mxu0 %v1052
    %1688 = vmatmul.bf16.gmra.mxu0 %v364
    %v1689 = vpop.f32.mrf.mxu0
    %v1690 = vadd.f32 %v347, %v1689
    %v1691 = vpop.f32.mrf.mxu0
    %1692 = vdwg.mxu0
    %1693 = vmatpush.bf16.msra.mxu0 %v1112
    %1694 = vmatpush.bf16.msra.mxu0 %v1108
    %1695 = vmatpush.bf16.msra.mxu0 %v1104
    %1696 = vmatpush.bf16.msra.mxu0 %v1100
    %1697 = vmatpush.bf16.msra.mxu0 %v1096
    %1698 = vmatpush.bf16.msra.mxu0 %v1092
    %1699 = vmatpush.bf16.msra.mxu0 %v1088
    %1700 = vmatpush.bf16.msra.mxu0 %v1084
    %1701 = vmatmul.bf16.gmra.mxu0 %v365
    %v1702 = vpop.f32.mrf.mxu0
    %v1703 = vadd.f32 %v1690, %v1702
    %v1704 = vpop.f32.mrf.mxu0
    %1705 = vdwg.mxu0
    %1706 = vmatpush.bf16.msra.mxu0 %v1144
    %1707 = vmatpush.bf16.msra.mxu0 %v1140
    %1708 = vmatpush.bf16.msra.mxu0 %v1136
    %1709 = vmatpush.bf16.msra.mxu0 %v1132
    %1710 = vmatpush.bf16.msra.mxu0 %v1128
    %1711 = vmatpush.bf16.msra.mxu0 %v1124
    %1712 = vmatpush.bf16.msra.mxu0 %v1120
    %1713 = vmatpush.bf16.msra.mxu0 %v1116
    %1714 = vmatmul.bf16.gmra.mxu0 %v366
    %v1715 = vpop.f32.mrf.mxu0
    %v1716 = vadd.f32 %v1703, %v1715
    %v1717 = vpop.f32.mrf.mxu0
    %1718 = vdwg.mxu0
    %1719 = vmatpush.bf16.msra.mxu0 %v1176
    %1720 = vmatpush.bf16.msra.mxu0 %v1172
    %1721 = vmatpush.bf16.msra.mxu0 %v1168
    %1722 = vmatpush.bf16.msra.mxu0 %v1164
    %1723 = vmatpush.bf16.msra.mxu0 %v1160
    %1724 = vmatpush.bf16.msra.mxu0 %v1156
    %1725 = vmatpush.bf16.msra.mxu0 %v1152
    %1726 = vmatpush.bf16.msra.mxu0 %v1148
    %1727 = vmatmul.bf16.gmra.mxu0 %v367
    %v1728 = vpop.f32.mrf.mxu0
    %v1729 = vadd.f32 %v1716, %v1728
    %v1730 = vpop.f32.mrf.mxu0
    %1731 = vdwg.mxu0
    %1732 = vmatpush.bf16.msra.mxu0 %v1208
    %1733 = vmatpush.bf16.msra.mxu0 %v1204
    %1734 = vmatpush.bf16.msra.mxu0 %v1200
    %1735 = vmatpush.bf16.msra.mxu0 %v1196
    %1736 = vmatpush.bf16.msra.mxu0 %v1192
    %1737 = vmatpush.bf16.msra.mxu0 %v1188
    %1738 = vmatpush.bf16.msra.mxu0 %v1184
    %1739 = vmatpush.bf16.msra.mxu0 %v1180
    %1740 = vmatmul.bf16.gmra.mxu0 %v368
    %v1741 = vpop.f32.mrf.mxu0
    %v1742 = vadd.f32 %v1729, %v1741
    %v1743 = vpop.f32.mrf.mxu0
    %1744 = vdwg.mxu0
    %1745 = vmatpush.bf16.msra.mxu0 %v1240
    %1746 = vmatpush.bf16.msra.mxu0 %v1236
    %1747 = vmatpush.bf16.msra.mxu0 %v1232
    %1748 = vmatpush.bf16.msra.mxu0 %v1228
    %1749 = vmatpush.bf16.msra.mxu0 %v1224
    %1750 = vmatpush.bf16.msra.mxu0 %v1220
    %1751 = vmatpush.bf16.msra.mxu0 %v1216
    %1752 = vmatpush.bf16.msra.mxu0 %v1212
    %1753 = vmatmul.bf16.gmra.mxu0 %v369
    %v1754 = vpop.f32.mrf.mxu0
    %v1755 = vadd.f32 %v1742, %v1754
    %v1756 = vpop.f32.mrf.mxu0
    %1757 = vdwg.mxu0
    %1758 = vmatpush.bf16.msra.mxu0 %v1272
    %1759 = vmatpush.bf16.msra.mxu0 %v1268
    %1760 = vmatpush.bf16.msra.mxu0 %v1264
    %1761 = vmatpush.bf16.msra.mxu0 %v1260
    %1762 = vmatpush.bf16.msra.mxu0 %v1256
    %1763 = vmatpush.bf16.msra.mxu0 %v1252
    %1764 = vmatpush.bf16.msra.mxu0 %v1248
    %1765 = vmatpush.bf16.msra.mxu0 %v1244
    %1766 = vmatmul.bf16.gmra.mxu0 %v370
    %v1767 = vpop.f32.mrf.mxu0
    %v1768 = vadd.f32 %v1755, %v1767
    %v1769 = vpop.f32.mrf.mxu0
    %1770 = vdwg.mxu0
    %1771 = vmatpush.bf16.msra.mxu0 %v1081
    %1772 = vmatpush.bf16.msra.mxu0 %v1077
    %1773 = vmatpush.bf16.msra.mxu0 %v1073
    %1774 = vmatpush.bf16.msra.mxu0 %v1069
    %1775 = vmatpush.bf16.msra.mxu0 %v1065
    %1776 = vmatpush.bf16.msra.mxu0 %v1061
    %1777 = vmatpush.bf16.msra.mxu0 %v1057
    %1778 = vmatpush.bf16.msra.mxu0 %v1053
    %1779 = vmatmul.bf16.gmra.mxu0 %v364
    %v1780 = vpop.f32.mrf.mxu0
    %v1781 = vadd.f32 %v348, %v1780
    %v1782 = vpop.f32.mrf.mxu0
    %1783 = vdwg.mxu0
    %1784 = vmatpush.bf16.msra.mxu0 %v1113
    %1785 = vmatpush.bf16.msra.mxu0 %v1109
    %1786 = vmatpush.bf16.msra.mxu0 %v1105
    %1787 = vmatpush.bf16.msra.mxu0 %v1101
    %1788 = vmatpush.bf16.msra.mxu0 %v1097
    %1789 = vmatpush.bf16.msra.mxu0 %v1093
    %1790 = vmatpush.bf16.msra.mxu0 %v1089
    %1791 = vmatpush.bf16.msra.mxu0 %v1085
    %1792 = vmatmul.bf16.gmra.mxu0 %v365
    %v1793 = vpop.f32.mrf.mxu0
    %v1794 = vadd.f32 %v1781, %v1793
    %v1795 = vpop.f32.mrf.mxu0
    %1796 = vdwg.mxu0
    %1797 = vmatpush.bf16.msra.mxu0 %v1145
    %1798 = vmatpush.bf16.msra.mxu0 %v1141
    %1799 = vmatpush.bf16.msra.mxu0 %v1137
    %1800 = vmatpush.bf16.msra.mxu0 %v1133
    %1801 = vmatpush.bf16.msra.mxu0 %v1129
    %1802 = vmatpush.bf16.msra.mxu0 %v1125
    %1803 = vmatpush.bf16.msra.mxu0 %v1121
    %1804 = vmatpush.bf16.msra.mxu0 %v1117
    %1805 = vmatmul.bf16.gmra.mxu0 %v366
    %v1806 = vpop.f32.mrf.mxu0
    %v1807 = vadd.f32 %v1794, %v1806
    %v1808 = vpop.f32.mrf.mxu0
    %1809 = vdwg.mxu0
    %1810 = vmatpush.bf16.msra.mxu0 %v1177
    %1811 = vmatpush.bf16.msra.mxu0 %v1173
    %1812 = vmatpush.bf16.msra.mxu0 %v1169
    %1813 = vmatpush.bf16.msra.mxu0 %v1165
    %1814 = vmatpush.bf16.msra.mxu0 %v1161
    %1815 = vmatpush.bf16.msra.mxu0 %v1157
    %1816 = vmatpush.bf16.msra.mxu0 %v1153
    %1817 = vmatpush.bf16.msra.mxu0 %v1149
    %1818 = vmatmul.bf16.gmra.mxu0 %v367
    %v1819 = vpop.f32.mrf.mxu0
    %v1820 = vadd.f32 %v1807, %v1819
    %v1821 = vpop.f32.mrf.mxu0
    %1822 = vdwg.mxu0
    %1823 = vmatpush.bf16.msra.mxu0 %v1209
    %1824 = vmatpush.bf16.msra.mxu0 %v1205
    %1825 = vmatpush.bf16.msra.mxu0 %v1201
    %1826 = vmatpush.bf16.msra.mxu0 %v1197
    %1827 = vmatpush.bf16.msra.mxu0 %v1193
    %1828 = vmatpush.bf16.msra.mxu0 %v1189
    %1829 = vmatpush.bf16.msra.mxu0 %v1185
    %1830 = vmatpush.bf16.msra.mxu0 %v1181
    %1831 = vmatmul.bf16.gmra.mxu0 %v368
    %v1832 = vpop.f32.mrf.mxu0
    %v1833 = vadd.f32 %v1820, %v1832
    %v1834 = vpop.f32.mrf.mxu0
    %1835 = vdwg.mxu0
    %1836 = vmatpush.bf16.msra.mxu0 %v1241
    %1837 = vmatpush.bf16.msra.mxu0 %v1237
    %1838 = vmatpush.bf16.msra.mxu0 %v1233
    %1839 = vmatpush.bf16.msra.mxu0 %v1229
    %1840 = vmatpush.bf16.msra.mxu0 %v1225
    %1841 = vmatpush.bf16.msra.mxu0 %v1221
    %1842 = vmatpush.bf16.msra.mxu0 %v1217
    %1843 = vmatpush.bf16.msra.mxu0 %v1213
    %1844 = vmatmul.bf16.gmra.mxu0 %v369
    %v1845 = vpop.f32.mrf.mxu0
    %v1846 = vadd.f32 %v1833, %v1845
    %v1847 = vpop.f32.mrf.mxu0
    %1848 = vdwg.mxu0
    %1849 = vmatpush.bf16.msra.mxu0 %v1273
    %1850 = vmatpush.bf16.msra.mxu0 %v1269
    %1851 = vmatpush.bf16.msra.mxu0 %v1265
    %1852 = vmatpush.bf16.msra.mxu0 %v1261
    %1853 = vmatpush.bf16.msra.mxu0 %v1257
    %1854 = vmatpush.bf16.msra.mxu0 %v1253
    %1855 = vmatpush.bf16.msra.mxu0 %v1249
    %1856 = vmatpush.bf16.msra.mxu0 %v1245
    %1857 = vmatmul.bf16.gmra.mxu0 %v370
    %v1858 = vpop.f32.mrf.mxu0
    %v1859 = vadd.f32 %v1846, %v1858
    %v1860 = vpop.f32.mrf.mxu0
    %1861 = vdwg.mxu0
    %v1862 = vmax.f32 %v1586, 0.0
    %v1863 = vmax.f32 %v1677, 0.0
    %v1864 = vmax.f32 %v1768, 0.0
    %v1865 = vmax.f32 %v1859, 0.0
    %v1866 = vpack.c.bf16 %v1862, %v1862
    %v1867 = vpack.c.bf16 %v1863, %v1863
    %v1868 = vpack.c.bf16 %v1864, %v1864
    %v1869 = vpack.c.bf16 %v1865, %v1865
    %v1870 = vld [vmem:[#allocation8] sm:$0xff]
    %v1871 = vld [vmem:[#allocation8 + $0x8] sm:$0xff]
    %v1872 = vld [vmem:[#allocation8 + $0x10] sm:$0xff]
    %v1873 = vld [vmem:[#allocation8 + $0x18] sm:$0xff]
    %v1874 = vld [vmem:[#allocation8 + $0x20] sm:$0xff]
    %v1875 = vld [vmem:[#allocation8 + $0x28] sm:$0xff]
    %v1876 = vld [vmem:[#allocation8 + $0x30] sm:$0xff]
    %v1877 = vld [vmem:[#allocation8 + $0x38] sm:$0xff]
    %v1878 = vld [vmem:[#allocation8 + $0x40] sm:$0xff]
    %v1879 = vld [vmem:[#allocation8 + $0x48] sm:$0xff]
    %v1880 = vld [vmem:[#allocation8 + $0x50] sm:$0xff]
    %v1881 = vld [vmem:[#allocation8 + $0x58] sm:$0xff]
    %v1882 = vld [vmem:[#allocation8 + $0x60] sm:$0xff]
    %v1883 = vld [vmem:[#allocation8 + $0x68] sm:$0xff]
    %v1884 = vld [vmem:[#allocation8 + $0x70] sm:$0xff]
    %v1885 = vld [vmem:[#allocation8 + $0x78] sm:$0xff]
    %v1886 = vld [vmem:[#allocation8 + $0x80] sm:$0xff]
    %v1887 = vld [vmem:[#allocation8 + $0x88] sm:$0xff]
    %v1888 = vld [vmem:[#allocation8 + $0x90] sm:$0xff]
    %v1889 = vld [vmem:[#allocation8 + $0x98] sm:$0xff]
    %v1890 = vld [vmem:[#allocation8 + $0xa0] sm:$0xff]
    %v1891 = vld [vmem:[#allocation8 + $0xa8] sm:$0xff]
    %v1892 = vld [vmem:[#allocation8 + $0xb0] sm:$0xff]
    %v1893 = vld [vmem:[#allocation8 + $0xb8] sm:$0xff]
    %v1894 = vld [vmem:[#allocation8 + $0xc0] sm:$0xff]
    %v1895 = vld [vmem:[#allocation8 + $0xc8] sm:$0xff]
    %v1896 = vld [vmem:[#allocation8 + $0xd0] sm:$0xff]
    %v1897 = vld [vmem:[#allocation8 + $0xd8] sm:$0xff]
    %v1898 = vld [vmem:[#allocation8 + $0xe0] sm:$0xff]
    %v1899 = vld [vmem:[#allocation8 + $0xe8] sm:$0xff]
    %v1900 = vld [vmem:[#allocation8 + $0xf0] sm:$0xff]
    %v1901 = vld [vmem:[#allocation8 + $0xf8] sm:$0xff]
    %v1902 = vld [vmem:[#allocation8 + $0x100] sm:$0xff]
    %v1903 = vld [vmem:[#allocation8 + $0x108] sm:$0xff]
    %v1904 = vld [vmem:[#allocation8 + $0x110] sm:$0xff]
    %v1905 = vld [vmem:[#allocation8 + $0x118] sm:$0xff]
    %v1906 = vld [vmem:[#allocation8 + $0x120] sm:$0xff]
    %v1907 = vld [vmem:[#allocation8 + $0x128] sm:$0xff]
    %v1908 = vld [vmem:[#allocation8 + $0x130] sm:$0xff]
    %v1909 = vld [vmem:[#allocation8 + $0x138] sm:$0xff]
    %v1910 = vld [vmem:[#allocation8 + $0x140] sm:$0xff]
    %v1911 = vld [vmem:[#allocation8 + $0x148] sm:$0xff]
    %v1912 = vld [vmem:[#allocation8 + $0x150] sm:$0xff]
    %v1913 = vld [vmem:[#allocation8 + $0x158] sm:$0xff]
    %v1914 = vld [vmem:[#allocation8 + $0x160] sm:$0xff]
    %v1915 = vld [vmem:[#allocation8 + $0x168] sm:$0xff]
    %v1916 = vld [vmem:[#allocation8 + $0x170] sm:$0xff]
    %v1917 = vld [vmem:[#allocation8 + $0x178] sm:$0xff]
    %v1918 = vld [vmem:[#allocation8 + $0x180] sm:$0xff]
    %v1919 = vld [vmem:[#allocation8 + $0x188] sm:$0xff]
    %v1920 = vld [vmem:[#allocation8 + $0x190] sm:$0xff]
    %v1921 = vld [vmem:[#allocation8 + $0x198] sm:$0xff]
    %v1922 = vld [vmem:[#allocation8 + $0x1a0] sm:$0xff]
    %v1923 = vld [vmem:[#allocation8 + $0x1a8] sm:$0xff]
    %v1924 = vld [vmem:[#allocation8 + $0x1b0] sm:$0xff]
    %v1925 = vld [vmem:[#allocation8 + $0x1b8] sm:$0xff]
    %v1926 = vld [vmem:[#allocation8 + $0x1c0] sm:$0xff]
    %v1927 = vld [vmem:[#allocation8 + $0x1c8] sm:$0xff]
    %v1928 = vld [vmem:[#allocation8 + $0x1d0] sm:$0xff]
    %v1929 = vld [vmem:[#allocation8 + $0x1d8] sm:$0xff]
    %v1930 = vld [vmem:[#allocation8 + $0x1e0] sm:$0xff]
    %v1931 = vld [vmem:[#allocation8 + $0x1e8] sm:$0xff]
    %v1932 = vld [vmem:[#allocation8 + $0x1f0] sm:$0xff]
    %v1933 = vld [vmem:[#allocation8 + $0x1f8] sm:$0xff]
    %v1934 = vld [vmem:[#allocation8 + $0x200] sm:$0xff]
    %v1935 = vld [vmem:[#allocation8 + $0x208] sm:$0xff]
    %v1936 = vld [vmem:[#allocation8 + $0x210] sm:$0xff]
    %v1937 = vld [vmem:[#allocation8 + $0x218] sm:$0xff]
    %v1938 = vld [vmem:[#allocation8 + $0x220] sm:$0xff]
    %v1939 = vld [vmem:[#allocation8 + $0x228] sm:$0xff]
    %v1940 = vld [vmem:[#allocation8 + $0x230] sm:$0xff]
    %v1941 = vld [vmem:[#allocation8 + $0x238] sm:$0xff]
    %v1942 = vld [vmem:[#allocation8 + $0x240] sm:$0xff]
    %v1943 = vld [vmem:[#allocation8 + $0x248] sm:$0xff]
    %v1944 = vld [vmem:[#allocation8 + $0x250] sm:$0xff]
    %v1945 = vld [vmem:[#allocation8 + $0x258] sm:$0xff]
    %v1946 = vld [vmem:[#allocation8 + $0x260] sm:$0xff]
    %v1947 = vld [vmem:[#allocation8 + $0x268] sm:$0xff]
    %v1948 = vld [vmem:[#allocation8 + $0x270] sm:$0xff]
    %v1949 = vld [vmem:[#allocation8 + $0x278] sm:$0xff]
    %v1950 = vld [vmem:[#allocation8 + $0x280] sm:$0xff]
    %v1951 = vld [vmem:[#allocation8 + $0x288] sm:$0xff]
    %v1952 = vld [vmem:[#allocation8 + $0x290] sm:$0xff]
    %v1953 = vld [vmem:[#allocation8 + $0x298] sm:$0xff]
    %v1954 = vld [vmem:[#allocation8 + $0x2a0] sm:$0xff]
    %v1955 = vld [vmem:[#allocation8 + $0x2a8] sm:$0xff]
    %v1956 = vld [vmem:[#allocation8 + $0x2b0] sm:$0xff]
    %v1957 = vld [vmem:[#allocation8 + $0x2b8] sm:$0xff]
    %v1958 = vld [vmem:[#allocation8 + $0x2c0] sm:$0xff]
    %v1959 = vld [vmem:[#allocation8 + $0x2c8] sm:$0xff]
    %v1960 = vld [vmem:[#allocation8 + $0x2d0] sm:$0xff]
    %v1961 = vld [vmem:[#allocation8 + $0x2d8] sm:$0xff]
    %v1962 = vld [vmem:[#allocation8 + $0x2e0] sm:$0xff]
    %v1963 = vld [vmem:[#allocation8 + $0x2e8] sm:$0xff]
    %v1964 = vld [vmem:[#allocation8 + $0x2f0] sm:$0xff]
    %v1965 = vld [vmem:[#allocation8 + $0x2f8] sm:$0xff]
    %v1966 = vld [vmem:[#allocation8 + $0x300] sm:$0xff]
    %v1967 = vld [vmem:[#allocation8 + $0x308] sm:$0xff]
    %v1968 = vld [vmem:[#allocation8 + $0x310] sm:$0xff]
    %v1969 = vld [vmem:[#allocation8 + $0x318] sm:$0xff]
    %v1970 = vld [vmem:[#allocation8 + $0x320] sm:$0xff]
    %v1971 = vld [vmem:[#allocation8 + $0x328] sm:$0xff]
    %v1972 = vld [vmem:[#allocation8 + $0x330] sm:$0xff]
    %v1973 = vld [vmem:[#allocation8 + $0x338] sm:$0xff]
    %v1974 = vld [vmem:[#allocation8 + $0x340] sm:$0xff]
    %v1975 = vld [vmem:[#allocation8 + $0x348] sm:$0xff]
    %v1976 = vld [vmem:[#allocation8 + $0x350] sm:$0xff]
    %v1977 = vld [vmem:[#allocation8 + $0x358] sm:$0xff]
    %v1978 = vld [vmem:[#allocation8 + $0x360] sm:$0xff]
    %v1979 = vld [vmem:[#allocation8 + $0x368] sm:$0xff]
    %v1980 = vld [vmem:[#allocation8 + $0x370] sm:$0xff]
    %v1981 = vld [vmem:[#allocation8 + $0x378] sm:$0xff]
    %v1982 = vld [vmem:[#allocation8 + $0x380] sm:$0xff]
    %v1983 = vld [vmem:[#allocation8 + $0x388] sm:$0xff]
    %v1984 = vld [vmem:[#allocation8 + $0x390] sm:$0xff]
    %v1985 = vld [vmem:[#allocation8 + $0x398] sm:$0xff]
    %v1986 = vld [vmem:[#allocation8 + $0x3a0] sm:$0xff]
    %v1987 = vld [vmem:[#allocation8 + $0x3a8] sm:$0xff]
    %v1988 = vld [vmem:[#allocation8 + $0x3b0] sm:$0xff]
    %v1989 = vld [vmem:[#allocation8 + $0x3b8] sm:$0xff]
    %v1990 = vld [vmem:[#allocation8 + $0x3c0] sm:$0xff]
    %v1991 = vld [vmem:[#allocation8 + $0x3c8] sm:$0xff]
    %v1992 = vld [vmem:[#allocation8 + $0x3d0] sm:$0xff]
    %v1993 = vld [vmem:[#allocation8 + $0x3d8] sm:$0xff]
    %v1994 = vld [vmem:[#allocation8 + $0x3e0] sm:$0xff]
    %v1995 = vld [vmem:[#allocation8 + $0x3e8] sm:$0xff]
    %v1996 = vld [vmem:[#allocation8 + $0x3f0] sm:$0xff]
    %v1997 = vld [vmem:[#allocation8 + $0x3f8] sm:$0xff]
    %v1998 = vld [vmem:[#allocation10] sm:$0xf]
    %v2000 = vperm.slane %v1998, 0
    %v2001 = vperm.slane %v1998, 1
    %v2002 = vperm.slane %v1998, 2
    %v2003 = vperm.slane %v1998, 3
    %v2136 = vunpack.c.l.b16 %v1870
    %v2137 = vunpack.c.h.b16 %v1870
    %v2138 = vunpack.c.l.b16 %v1871
    %v2139 = vunpack.c.h.b16 %v1871
    %v2140 = vunpack.c.l.b16 %v1872
    %v2141 = vunpack.c.h.b16 %v1872
    %v2142 = vunpack.c.l.b16 %v1873
    %v2143 = vunpack.c.h.b16 %v1873
    %v2144 = vunpack.c.l.b16 %v1874
    %v2145 = vunpack.c.h.b16 %v1874
    %v2146 = vunpack.c.l.b16 %v1875
    %v2147 = vunpack.c.h.b16 %v1875
    %v2148 = vunpack.c.l.b16 %v1876
    %v2149 = vunpack.c.h.b16 %v1876
    %v2150 = vunpack.c.l.b16 %v1877
    %v2151 = vunpack.c.h.b16 %v1877
    %v2152 = vunpack.c.l.b16 %v1878
    %v2153 = vunpack.c.h.b16 %v1878
    %v2154 = vunpack.c.l.b16 %v1879
    %v2155 = vunpack.c.h.b16 %v1879
    %v2156 = vunpack.c.l.b16 %v1880
    %v2157 = vunpack.c.h.b16 %v1880
    %v2158 = vunpack.c.l.b16 %v1881
    %v2159 = vunpack.c.h.b16 %v1881
    %v2160 = vunpack.c.l.b16 %v1882
    %v2161 = vunpack.c.h.b16 %v1882
    %v2162 = vunpack.c.l.b16 %v1883
    %v2163 = vunpack.c.h.b16 %v1883
    %v2164 = vunpack.c.l.b16 %v1884
    %v2165 = vunpack.c.h.b16 %v1884
    %v2166 = vunpack.c.l.b16 %v1885
    %v2167 = vunpack.c.h.b16 %v1885
    %v2168 = vunpack.c.l.b16 %v1886
    %v2169 = vunpack.c.h.b16 %v1886
    %v2170 = vunpack.c.l.b16 %v1887
    %v2171 = vunpack.c.h.b16 %v1887
    %v2172 = vunpack.c.l.b16 %v1888
    %v2173 = vunpack.c.h.b16 %v1888
    %v2174 = vunpack.c.l.b16 %v1889
    %v2175 = vunpack.c.h.b16 %v1889
    %v2176 = vunpack.c.l.b16 %v1890
    %v2177 = vunpack.c.h.b16 %v1890
    %v2178 = vunpack.c.l.b16 %v1891
    %v2179 = vunpack.c.h.b16 %v1891
    %v2180 = vunpack.c.l.b16 %v1892
    %v2181 = vunpack.c.h.b16 %v1892
    %v2182 = vunpack.c.l.b16 %v1893
    %v2183 = vunpack.c.h.b16 %v1893
    %v2184 = vunpack.c.l.b16 %v1894
    %v2185 = vunpack.c.h.b16 %v1894
    %v2186 = vunpack.c.l.b16 %v1895
    %v2187 = vunpack.c.h.b16 %v1895
    %v2188 = vunpack.c.l.b16 %v1896
    %v2189 = vunpack.c.h.b16 %v1896
    %v2190 = vunpack.c.l.b16 %v1897
    %v2191 = vunpack.c.h.b16 %v1897
    %v2192 = vunpack.c.l.b16 %v1898
    %v2193 = vunpack.c.h.b16 %v1898
    %v2194 = vunpack.c.l.b16 %v1899
    %v2195 = vunpack.c.h.b16 %v1899
    %v2196 = vunpack.c.l.b16 %v1900
    %v2197 = vunpack.c.h.b16 %v1900
    %v2198 = vunpack.c.l.b16 %v1901
    %v2199 = vunpack.c.h.b16 %v1901
    %v2200 = vunpack.c.l.b16 %v1902
    %v2201 = vunpack.c.h.b16 %v1902
    %v2202 = vunpack.c.l.b16 %v1903
    %v2203 = vunpack.c.h.b16 %v1903
    %v2204 = vunpack.c.l.b16 %v1904
    %v2205 = vunpack.c.h.b16 %v1904
    %v2206 = vunpack.c.l.b16 %v1905
    %v2207 = vunpack.c.h.b16 %v1905
    %v2208 = vunpack.c.l.b16 %v1906
    %v2209 = vunpack.c.h.b16 %v1906
    %v2210 = vunpack.c.l.b16 %v1907
    %v2211 = vunpack.c.h.b16 %v1907
    %v2212 = vunpack.c.l.b16 %v1908
    %v2213 = vunpack.c.h.b16 %v1908
    %v2214 = vunpack.c.l.b16 %v1909
    %v2215 = vunpack.c.h.b16 %v1909
    %v2216 = vunpack.c.l.b16 %v1910
    %v2217 = vunpack.c.h.b16 %v1910
    %v2218 = vunpack.c.l.b16 %v1911
    %v2219 = vunpack.c.h.b16 %v1911
    %v2220 = vunpack.c.l.b16 %v1912
    %v2221 = vunpack.c.h.b16 %v1912
    %v2222 = vunpack.c.l.b16 %v1913
    %v2223 = vunpack.c.h.b16 %v1913
    %v2224 = vunpack.c.l.b16 %v1914
    %v2225 = vunpack.c.h.b16 %v1914
    %v2226 = vunpack.c.l.b16 %v1915
    %v2227 = vunpack.c.h.b16 %v1915
    %v2228 = vunpack.c.l.b16 %v1916
    %v2229 = vunpack.c.h.b16 %v1916
    %v2230 = vunpack.c.l.b16 %v1917
    %v2231 = vunpack.c.h.b16 %v1917
    %v2232 = vunpack.c.l.b16 %v1918
    %v2233 = vunpack.c.h.b16 %v1918
    %v2234 = vunpack.c.l.b16 %v1919
    %v2235 = vunpack.c.h.b16 %v1919
    %v2236 = vunpack.c.l.b16 %v1920
    %v2237 = vunpack.c.h.b16 %v1920
    %v2238 = vunpack.c.l.b16 %v1921
    %v2239 = vunpack.c.h.b16 %v1921
    %v2240 = vunpack.c.l.b16 %v1922
    %v2241 = vunpack.c.h.b16 %v1922
    %v2242 = vunpack.c.l.b16 %v1923
    %v2243 = vunpack.c.h.b16 %v1923
    %v2244 = vunpack.c.l.b16 %v1924
    %v2245 = vunpack.c.h.b16 %v1924
    %v2246 = vunpack.c.l.b16 %v1925
    %v2247 = vunpack.c.h.b16 %v1925
    %v2248 = vunpack.c.l.b16 %v1926
    %v2249 = vunpack.c.h.b16 %v1926
    %v2250 = vunpack.c.l.b16 %v1927
    %v2251 = vunpack.c.h.b16 %v1927
    %v2252 = vunpack.c.l.b16 %v1928
    %v2253 = vunpack.c.h.b16 %v1928
    %v2254 = vunpack.c.l.b16 %v1929
    %v2255 = vunpack.c.h.b16 %v1929
    %v2256 = vunpack.c.l.b16 %v1930
    %v2257 = vunpack.c.h.b16 %v1930
    %v2258 = vunpack.c.l.b16 %v1931
    %v2259 = vunpack.c.h.b16 %v1931
    %v2260 = vunpack.c.l.b16 %v1932
    %v2261 = vunpack.c.h.b16 %v1932
    %v2262 = vunpack.c.l.b16 %v1933
    %v2263 = vunpack.c.h.b16 %v1933
    %v2264 = vunpack.c.l.b16 %v1934
    %v2265 = vunpack.c.h.b16 %v1934
    %v2266 = vunpack.c.l.b16 %v1935
    %v2267 = vunpack.c.h.b16 %v1935
    %v2268 = vunpack.c.l.b16 %v1936
    %v2269 = vunpack.c.h.b16 %v1936
    %v2270 = vunpack.c.l.b16 %v1937
    %v2271 = vunpack.c.h.b16 %v1937
    %v2272 = vunpack.c.l.b16 %v1938
    %v2273 = vunpack.c.h.b16 %v1938
    %v2274 = vunpack.c.l.b16 %v1939
    %v2275 = vunpack.c.h.b16 %v1939
    %v2276 = vunpack.c.l.b16 %v1940
    %v2277 = vunpack.c.h.b16 %v1940
    %v2278 = vunpack.c.l.b16 %v1941
    %v2279 = vunpack.c.h.b16 %v1941
    %v2280 = vunpack.c.l.b16 %v1942
    %v2281 = vunpack.c.h.b16 %v1942
    %v2282 = vunpack.c.l.b16 %v1943
    %v2283 = vunpack.c.h.b16 %v1943
    %v2284 = vunpack.c.l.b16 %v1944
    %v2285 = vunpack.c.h.b16 %v1944
    %v2286 = vunpack.c.l.b16 %v1945
    %v2287 = vunpack.c.h.b16 %v1945
    %v2288 = vunpack.c.l.b16 %v1946
    %v2289 = vunpack.c.h.b16 %v1946
    %v2290 = vunpack.c.l.b16 %v1947
    %v2291 = vunpack.c.h.b16 %v1947
    %v2292 = vunpack.c.l.b16 %v1948
    %v2293 = vunpack.c.h.b16 %v1948
    %v2294 = vunpack.c.l.b16 %v1949
    %v2295 = vunpack.c.h.b16 %v1949
    %v2296 = vunpack.c.l.b16 %v1950
    %v2297 = vunpack.c.h.b16 %v1950
    %v2298 = vunpack.c.l.b16 %v1951
    %v2299 = vunpack.c.h.b16 %v1951
    %v2300 = vunpack.c.l.b16 %v1952
    %v2301 = vunpack.c.h.b16 %v1952
    %v2302 = vunpack.c.l.b16 %v1953
    %v2303 = vunpack.c.h.b16 %v1953
    %v2304 = vunpack.c.l.b16 %v1954
    %v2305 = vunpack.c.h.b16 %v1954
    %v2306 = vunpack.c.l.b16 %v1955
    %v2307 = vunpack.c.h.b16 %v1955
    %v2308 = vunpack.c.l.b16 %v1956
    %v2309 = vunpack.c.h.b16 %v1956
    %v2310 = vunpack.c.l.b16 %v1957
    %v2311 = vunpack.c.h.b16 %v1957
    %v2312 = vunpack.c.l.b16 %v1958
    %v2313 = vunpack.c.h.b16 %v1958
    %v2314 = vunpack.c.l.b16 %v1959
    %v2315 = vunpack.c.h.b16 %v1959
    %v2316 = vunpack.c.l.b16 %v1960
    %v2317 = vunpack.c.h.b16 %v1960
    %v2318 = vunpack.c.l.b16 %v1961
    %v2319 = vunpack.c.h.b16 %v1961
    %v2320 = vunpack.c.l.b16 %v1962
    %v2321 = vunpack.c.h.b16 %v1962
    %v2322 = vunpack.c.l.b16 %v1963
    %v2323 = vunpack.c.h.b16 %v1963
    %v2324 = vunpack.c.l.b16 %v1964
    %v2325 = vunpack.c.h.b16 %v1964
    %v2326 = vunpack.c.l.b16 %v1965
    %v2327 = vunpack.c.h.b16 %v1965
    %v2328 = vunpack.c.l.b16 %v1966
    %v2329 = vunpack.c.h.b16 %v1966
    %v2330 = vunpack.c.l.b16 %v1967
    %v2331 = vunpack.c.h.b16 %v1967
    %v2332 = vunpack.c.l.b16 %v1968
    %v2333 = vunpack.c.h.b16 %v1968
    %v2334 = vunpack.c.l.b16 %v1969
    %v2335 = vunpack.c.h.b16 %v1969
    %v2336 = vunpack.c.l.b16 %v1970
    %v2337 = vunpack.c.h.b16 %v1970
    %v2338 = vunpack.c.l.b16 %v1971
    %v2339 = vunpack.c.h.b16 %v1971
    %v2340 = vunpack.c.l.b16 %v1972
    %v2341 = vunpack.c.h.b16 %v1972
    %v2342 = vunpack.c.l.b16 %v1973
    %v2343 = vunpack.c.h.b16 %v1973
    %v2344 = vunpack.c.l.b16 %v1974
    %v2345 = vunpack.c.h.b16 %v1974
    %v2346 = vunpack.c.l.b16 %v1975
    %v2347 = vunpack.c.h.b16 %v1975
    %v2348 = vunpack.c.l.b16 %v1976
    %v2349 = vunpack.c.h.b16 %v1976
    %v2350 = vunpack.c.l.b16 %v1977
    %v2351 = vunpack.c.h.b16 %v1977
    %v2352 = vunpack.c.l.b16 %v1978
    %v2353 = vunpack.c.h.b16 %v1978
    %v2354 = vunpack.c.l.b16 %v1979
    %v2355 = vunpack.c.h.b16 %v1979
    %v2356 = vunpack.c.l.b16 %v1980
    %v2357 = vunpack.c.h.b16 %v1980
    %v2358 = vunpack.c.l.b16 %v1981
    %v2359 = vunpack.c.h.b16 %v1981
    %v2360 = vunpack.c.l.b16 %v1982
    %v2361 = vunpack.c.h.b16 %v1982
    %v2362 = vunpack.c.l.b16 %v1983
    %v2363 = vunpack.c.h.b16 %v1983
    %v2364 = vunpack.c.l.b16 %v1984
    %v2365 = vunpack.c.h.b16 %v1984
    %v2366 = vunpack.c.l.b16 %v1985
    %v2367 = vunpack.c.h.b16 %v1985
    %v2368 = vunpack.c.l.b16 %v1986
    %v2369 = vunpack.c.h.b16 %v1986
    %v2370 = vunpack.c.l.b16 %v1987
    %v2371 = vunpack.c.h.b16 %v1987
    %v2372 = vunpack.c.l.b16 %v1988
    %v2373 = vunpack.c.h.b16 %v1988
    %v2374 = vunpack.c.l.b16 %v1989
    %v2375 = vunpack.c.h.b16 %v1989
    %v2376 = vunpack.c.l.b16 %v1990
    %v2377 = vunpack.c.h.b16 %v1990
    %v2378 = vunpack.c.l.b16 %v1991
    %v2379 = vunpack.c.h.b16 %v1991
    %v2380 = vunpack.c.l.b16 %v1992
    %v2381 = vunpack.c.h.b16 %v1992
    %v2382 = vunpack.c.l.b16 %v1993
    %v2383 = vunpack.c.h.b16 %v1993
    %v2384 = vunpack.c.l.b16 %v1994
    %v2385 = vunpack.c.h.b16 %v1994
    %v2386 = vunpack.c.l.b16 %v1995
    %v2387 = vunpack.c.h.b16 %v1995
    %v2388 = vunpack.c.l.b16 %v1996
    %v2389 = vunpack.c.h.b16 %v1996
    %v2390 = vunpack.c.l.b16 %v1997
    %v2391 = vunpack.c.h.b16 %v1997
    %v2392 = vpack.c.b16 %v2140, %v2136
    %v2393 = vpack.c.b16 %v2141, %v2137
    %v2394 = vpack.c.b16 %v2142, %v2138
    %v2395 = vpack.c.b16 %v2143, %v2139
    %v2396 = vpack.c.b16 %v2148, %v2144
    %v2397 = vpack.c.b16 %v2149, %v2145
    %v2398 = vpack.c.b16 %v2150, %v2146
    %v2399 = vpack.c.b16 %v2151, %v2147
    %v2400 = vpack.c.b16 %v2156, %v2152
    %v2401 = vpack.c.b16 %v2157, %v2153
    %v2402 = vpack.c.b16 %v2158, %v2154
    %v2403 = vpack.c.b16 %v2159, %v2155
    %v2404 = vpack.c.b16 %v2164, %v2160
    %v2405 = vpack.c.b16 %v2165, %v2161
    %v2406 = vpack.c.b16 %v2166, %v2162
    %v2407 = vpack.c.b16 %v2167, %v2163
    %v2408 = vpack.c.b16 %v2172, %v2168
    %v2409 = vpack.c.b16 %v2173, %v2169
    %v2410 = vpack.c.b16 %v2174, %v2170
    %v2411 = vpack.c.b16 %v2175, %v2171
    %v2412 = vpack.c.b16 %v2180, %v2176
    %v2413 = vpack.c.b16 %v2181, %v2177
    %v2414 = vpack.c.b16 %v2182, %v2178
    %v2415 = vpack.c.b16 %v2183, %v2179
    %v2416 = vpack.c.b16 %v2188, %v2184
    %v2417 = vpack.c.b16 %v2189, %v2185
    %v2418 = vpack.c.b16 %v2190, %v2186
    %v2419 = vpack.c.b16 %v2191, %v2187
    %v2420 = vpack.c.b16 %v2196, %v2192
    %v2421 = vpack.c.b16 %v2197, %v2193
    %v2422 = vpack.c.b16 %v2198, %v2194
    %v2423 = vpack.c.b16 %v2199, %v2195
    %v2424 = vpack.c.b16 %v2204, %v2200
    %v2425 = vpack.c.b16 %v2205, %v2201
    %v2426 = vpack.c.b16 %v2206, %v2202
    %v2427 = vpack.c.b16 %v2207, %v2203
    %v2428 = vpack.c.b16 %v2212, %v2208
    %v2429 = vpack.c.b16 %v2213, %v2209
    %v2430 = vpack.c.b16 %v2214, %v2210
    %v2431 = vpack.c.b16 %v2215, %v2211
    %v2432 = vpack.c.b16 %v2220, %v2216
    %v2433 = vpack.c.b16 %v2221, %v2217
    %v2434 = vpack.c.b16 %v2222, %v2218
    %v2435 = vpack.c.b16 %v2223, %v2219
    %v2436 = vpack.c.b16 %v2228, %v2224
    %v2437 = vpack.c.b16 %v2229, %v2225
    %v2438 = vpack.c.b16 %v2230, %v2226
    %v2439 = vpack.c.b16 %v2231, %v2227
    %v2440 = vpack.c.b16 %v2236, %v2232
    %v2441 = vpack.c.b16 %v2237, %v2233
    %v2442 = vpack.c.b16 %v2238, %v2234
    %v2443 = vpack.c.b16 %v2239, %v2235
    %v2444 = vpack.c.b16 %v2244, %v2240
    %v2445 = vpack.c.b16 %v2245, %v2241
    %v2446 = vpack.c.b16 %v2246, %v2242
    %v2447 = vpack.c.b16 %v2247, %v2243
    %v2448 = vpack.c.b16 %v2252, %v2248
    %v2449 = vpack.c.b16 %v2253, %v2249
    %v2450 = vpack.c.b16 %v2254, %v2250
    %v2451 = vpack.c.b16 %v2255, %v2251
    %v2452 = vpack.c.b16 %v2260, %v2256
    %v2453 = vpack.c.b16 %v2261, %v2257
    %v2454 = vpack.c.b16 %v2262, %v2258
    %v2455 = vpack.c.b16 %v2263, %v2259
    %v2456 = vpack.c.b16 %v2268, %v2264
    %v2457 = vpack.c.b16 %v2269, %v2265
    %v2458 = vpack.c.b16 %v2270, %v2266
    %v2459 = vpack.c.b16 %v2271, %v2267
    %v2460 = vpack.c.b16 %v2276, %v2272
    %v2461 = vpack.c.b16 %v2277, %v2273
    %v2462 = vpack.c.b16 %v2278, %v2274
    %v2463 = vpack.c.b16 %v2279, %v2275
    %v2464 = vpack.c.b16 %v2284, %v2280
    %v2465 = vpack.c.b16 %v2285, %v2281
    %v2466 = vpack.c.b16 %v2286, %v2282
    %v2467 = vpack.c.b16 %v2287, %v2283
    %v2468 = vpack.c.b16 %v2292, %v2288
    %v2469 = vpack.c.b16 %v2293, %v2289
    %v2470 = vpack.c.b16 %v2294, %v2290
    %v2471 = vpack.c.b16 %v2295, %v2291
    %v2472 = vpack.c.b16 %v2300, %v2296
    %v2473 = vpack.c.b16 %v2301, %v2297
    %v2474 = vpack.c.b16 %v2302, %v2298
    %v2475 = vpack.c.b16 %v2303, %v2299
    %v2476 = vpack.c.b16 %v2308, %v2304
    %v2477 = vpack.c.b16 %v2309, %v2305
    %v2478 = vpack.c.b16 %v2310, %v2306
    %v2479 = vpack.c.b16 %v2311, %v2307
    %v2480 = vpack.c.b16 %v2316, %v2312
    %v2481 = vpack.c.b16 %v2317, %v2313
    %v2482 = vpack.c.b16 %v2318, %v2314
    %v2483 = vpack.c.b16 %v2319, %v2315
    %v2484 = vpack.c.b16 %v2324, %v2320
    %v2485 = vpack.c.b16 %v2325, %v2321
    %v2486 = vpack.c.b16 %v2326, %v2322
    %v2487 = vpack.c.b16 %v2327, %v2323
    %v2488 = vpack.c.b16 %v2332, %v2328
    %v2489 = vpack.c.b16 %v2333, %v2329
    %v2490 = vpack.c.b16 %v2334, %v2330
    %v2491 = vpack.c.b16 %v2335, %v2331
    %v2492 = vpack.c.b16 %v2340, %v2336
    %v2493 = vpack.c.b16 %v2341, %v2337
    %v2494 = vpack.c.b16 %v2342, %v2338
    %v2495 = vpack.c.b16 %v2343, %v2339
    %v2496 = vpack.c.b16 %v2348, %v2344
    %v2497 = vpack.c.b16 %v2349, %v2345
    %v2498 = vpack.c.b16 %v2350, %v2346
    %v2499 = vpack.c.b16 %v2351, %v2347
    %v2500 = vpack.c.b16 %v2356, %v2352
    %v2501 = vpack.c.b16 %v2357, %v2353
    %v2502 = vpack.c.b16 %v2358, %v2354
    %v2503 = vpack.c.b16 %v2359, %v2355
    %v2504 = vpack.c.b16 %v2364, %v2360
    %v2505 = vpack.c.b16 %v2365, %v2361
    %v2506 = vpack.c.b16 %v2366, %v2362
    %v2507 = vpack.c.b16 %v2367, %v2363
    %v2508 = vpack.c.b16 %v2372, %v2368
    %v2509 = vpack.c.b16 %v2373, %v2369
    %v2510 = vpack.c.b16 %v2374, %v2370
    %v2511 = vpack.c.b16 %v2375, %v2371
    %v2512 = vpack.c.b16 %v2380, %v2376
    %v2513 = vpack.c.b16 %v2381, %v2377
    %v2514 = vpack.c.b16 %v2382, %v2378
    %v2515 = vpack.c.b16 %v2383, %v2379
    %v2516 = vpack.c.b16 %v2388, %v2384
    %v2517 = vpack.c.b16 %v2389, %v2385
    %v2518 = vpack.c.b16 %v2390, %v2386
    %v2519 = vpack.c.b16 %v2391, %v2387
    %2648 = vmatpush.bf16.msra.mxu0 %v2420
    %2649 = vmatpush.bf16.msra.mxu0 %v2416
    %2650 = vmatpush.bf16.msra.mxu0 %v2412
    %2651 = vmatpush.bf16.msra.mxu0 %v2408
    %2652 = vmatpush.bf16.msra.mxu0 %v2404
    %2653 = vmatpush.bf16.msra.mxu0 %v2400
    %2654 = vmatpush.bf16.msra.mxu0 %v2396
    %2655 = vmatpush.bf16.msra.mxu0 %v2392
    %2656 = vmatmul.bf16.gmra.mxu0 %v1866
    %v2657 = vpop.f32.mrf.mxu0
    %v2658 = vadd.f32 %v2000, %v2657
    %v2659 = vpop.f32.mrf.mxu0
    %2660 = vdwg.mxu0
    %2661 = vmatpush.bf16.msra.mxu0 %v2452
    %2662 = vmatpush.bf16.msra.mxu0 %v2448
    %2663 = vmatpush.bf16.msra.mxu0 %v2444
    %2664 = vmatpush.bf16.msra.mxu0 %v2440
    %2665 = vmatpush.bf16.msra.mxu0 %v2436
    %2666 = vmatpush.bf16.msra.mxu0 %v2432
    %2667 = vmatpush.bf16.msra.mxu0 %v2428
    %2668 = vmatpush.bf16.msra.mxu0 %v2424
    %2669 = vmatmul.bf16.gmra.mxu0 %v1867
    %v2670 = vpop.f32.mrf.mxu0
    %v2671 = vadd.f32 %v2658, %v2670
    %v2672 = vpop.f32.mrf.mxu0
    %2673 = vdwg.mxu0
    %2674 = vmatpush.bf16.msra.mxu0 %v2484
    %2675 = vmatpush.bf16.msra.mxu0 %v2480
    %2676 = vmatpush.bf16.msra.mxu0 %v2476
    %2677 = vmatpush.bf16.msra.mxu0 %v2472
    %2678 = vmatpush.bf16.msra.mxu0 %v2468
    %2679 = vmatpush.bf16.msra.mxu0 %v2464
    %2680 = vmatpush.bf16.msra.mxu0 %v2460
    %2681 = vmatpush.bf16.msra.mxu0 %v2456
    %2682 = vmatmul.bf16.gmra.mxu0 %v1868
    %v2683 = vpop.f32.mrf.mxu0
    %v2684 = vadd.f32 %v2671, %v2683
    %v2685 = vpop.f32.mrf.mxu0
    %2686 = vdwg.mxu0
    %2687 = vmatpush.bf16.msra.mxu0 %v2516
    %2688 = vmatpush.bf16.msra.mxu0 %v2512
    %2689 = vmatpush.bf16.msra.mxu0 %v2508
    %2690 = vmatpush.bf16.msra.mxu0 %v2504
    %2691 = vmatpush.bf16.msra.mxu0 %v2500
    %2692 = vmatpush.bf16.msra.mxu0 %v2496
    %2693 = vmatpush.bf16.msra.mxu0 %v2492
    %2694 = vmatpush.bf16.msra.mxu0 %v2488
    %2695 = vmatmul.bf16.gmra.mxu0 %v1869
    %v2696 = vpop.f32.mrf.mxu0
    %v2697 = vadd.f32 %v2684, %v2696
    %v2698 = vpop.f32.mrf.mxu0
    %2699 = vdwg.mxu0
    %2700 = vmatpush.bf16.msra.mxu0 %v2421
    %2701 = vmatpush.bf16.msra.mxu0 %v2417
    %2702 = vmatpush.bf16.msra.mxu0 %v2413
    %2703 = vmatpush.bf16.msra.mxu0 %v2409
    %2704 = vmatpush.bf16.msra.mxu0 %v2405
    %2705 = vmatpush.bf16.msra.mxu0 %v2401
    %2706 = vmatpush.bf16.msra.mxu0 %v2397
    %2707 = vmatpush.bf16.msra.mxu0 %v2393
    %2708 = vmatmul.bf16.gmra.mxu0 %v1866
    %v2709 = vpop.f32.mrf.mxu0
    %v2710 = vadd.f32 %v2001, %v2709
    %v2711 = vpop.f32.mrf.mxu0
    %2712 = vdwg.mxu0
    %2713 = vmatpush.bf16.msra.mxu0 %v2453
    %2714 = vmatpush.bf16.msra.mxu0 %v2449
    %2715 = vmatpush.bf16.msra.mxu0 %v2445
    %2716 = vmatpush.bf16.msra.mxu0 %v2441
    %2717 = vmatpush.bf16.msra.mxu0 %v2437
    %2718 = vmatpush.bf16.msra.mxu0 %v2433
    %2719 = vmatpush.bf16.msra.mxu0 %v2429
    %2720 = vmatpush.bf16.msra.mxu0 %v2425
    %2721 = vmatmul.bf16.gmra.mxu0 %v1867
    %v2722 = vpop.f32.mrf.mxu0
    %v2723 = vadd.f32 %v2710, %v2722
    %v2724 = vpop.f32.mrf.mxu0
    %2725 = vdwg.mxu0
    %2726 = vmatpush.bf16.msra.mxu0 %v2485
    %2727 = vmatpush.bf16.msra.mxu0 %v2481
    %2728 = vmatpush.bf16.msra.mxu0 %v2477
    %2729 = vmatpush.bf16.msra.mxu0 %v2473
    %2730 = vmatpush.bf16.msra.mxu0 %v2469
    %2731 = vmatpush.bf16.msra.mxu0 %v2465
    %2732 = vmatpush.bf16.msra.mxu0 %v2461
    %2733 = vmatpush.bf16.msra.mxu0 %v2457
    %2734 = vmatmul.bf16.gmra.mxu0 %v1868
    %v2735 = vpop.f32.mrf.mxu0
    %v2736 = vadd.f32 %v2723, %v2735
    %v2737 = vpop.f32.mrf.mxu0
    %2738 = vdwg.mxu0
    %2739 = vmatpush.bf16.msra.mxu0 %v2517
    %2740 = vmatpush.bf16.msra.mxu0 %v2513
    %2741 = vmatpush.bf16.msra.mxu0 %v2509
    %2742 = vmatpush.bf16.msra.mxu0 %v2505
    %2743 = vmatpush.bf16.msra.mxu0 %v2501
    %2744 = vmatpush.bf16.msra.mxu0 %v2497
    %2745 = vmatpush.bf16.msra.mxu0 %v2493
    %2746 = vmatpush.bf16.msra.mxu0 %v2489
    %2747 = vmatmul.bf16.gmra.mxu0 %v1869
    %v2748 = vpop.f32.mrf.mxu0
    %v2749 = vadd.f32 %v2736, %v2748
    %v2750 = vpop.f32.mrf.mxu0
    %2751 = vdwg.mxu0
    %2752 = vmatpush.bf16.msra.mxu0 %v2422
    %2753 = vmatpush.bf16.msra.mxu0 %v2418
    %2754 = vmatpush.bf16.msra.mxu0 %v2414
    %2755 = vmatpush.bf16.msra.mxu0 %v2410
    %2756 = vmatpush.bf16.msra.mxu0 %v2406
    %2757 = vmatpush.bf16.msra.mxu0 %v2402
    %2758 = vmatpush.bf16.msra.mxu0 %v2398
    %2759 = vmatpush.bf16.msra.mxu0 %v2394
    %2760 = vmatmul.bf16.gmra.mxu0 %v1866
    %v2761 = vpop.f32.mrf.mxu0
    %v2762 = vadd.f32 %v2002, %v2761
    %v2763 = vpop.f32.mrf.mxu0
    %2764 = vdwg.mxu0
    %2765 = vmatpush.bf16.msra.mxu0 %v2454
    %2766 = vmatpush.bf16.msra.mxu0 %v2450
    %2767 = vmatpush.bf16.msra.mxu0 %v2446
    %2768 = vmatpush.bf16.msra.mxu0 %v2442
    %2769 = vmatpush.bf16.msra.mxu0 %v2438
    %2770 = vmatpush.bf16.msra.mxu0 %v2434
    %2771 = vmatpush.bf16.msra.mxu0 %v2430
    %2772 = vmatpush.bf16.msra.mxu0 %v2426
    %2773 = vmatmul.bf16.gmra.mxu0 %v1867
    %v2774 = vpop.f32.mrf.mxu0
    %v2775 = vadd.f32 %v2762, %v2774
    %v2776 = vpop.f32.mrf.mxu0
    %2777 = vdwg.mxu0
    %2778 = vmatpush.bf16.msra.mxu0 %v2486
    %2779 = vmatpush.bf16.msra.mxu0 %v2482
    %2780 = vmatpush.bf16.msra.mxu0 %v2478
    %2781 = vmatpush.bf16.msra.mxu0 %v2474
    %2782 = vmatpush.bf16.msra.mxu0 %v2470
    %2783 = vmatpush.bf16.msra.mxu0 %v2466
    %2784 = vmatpush.bf16.msra.mxu0 %v2462
    %2785 = vmatpush.bf16.msra.mxu0 %v2458
    %2786 = vmatmul.bf16.gmra.mxu0 %v1868
    %v2787 = vpop.f32.mrf.mxu0
    %v2788 = vadd.f32 %v2775, %v2787
    %v2789 = vpop.f32.mrf.mxu0
    %2790 = vdwg.mxu0
    %2791 = vmatpush.bf16.msra.mxu0 %v2518
    %2792 = vmatpush.bf16.msra.mxu0 %v2514
    %2793 = vmatpush.bf16.msra.mxu0 %v2510
    %2794 = vmatpush.bf16.msra.mxu0 %v2506
    %2795 = vmatpush.bf16.msra.mxu0 %v2502
    %2796 = vmatpush.bf16.msra.mxu0 %v2498
    %2797 = vmatpush.bf16.msra.mxu0 %v2494
    %2798 = vmatpush.bf16.msra.mxu0 %v2490
    %2799 = vmatmul.bf16.gmra.mxu0 %v1869
    %v2800 = vpop.f32.mrf.mxu0
    %v2801 = vadd.f32 %v2788, %v2800
    %v2802 = vpop.f32.mrf.mxu0
    %2803 = vdwg.mxu0
    %2804 = vmatpush.bf16.msra.mxu0 %v2423
    %2805 = vmatpush.bf16.msra.mxu0 %v2419
    %2806 = vmatpush.bf16.msra.mxu0 %v2415
    %2807 = vmatpush.bf16.msra.mxu0 %v2411
    %2808 = vmatpush.bf16.msra.mxu0 %v2407
    %2809 = vmatpush.bf16.msra.mxu0 %v2403
    %2810 = vmatpush.bf16.msra.mxu0 %v2399
    %2811 = vmatpush.bf16.msra.mxu0 %v2395
    %2812 = vmatmul.bf16.gmra.mxu0 %v1866
    %v2813 = vpop.f32.mrf.mxu0
    %v2814 = vadd.f32 %v2003, %v2813
    %v2815 = vpop.f32.mrf.mxu0
    %2816 = vdwg.mxu0
    %2817 = vmatpush.bf16.msra.mxu0 %v2455
    %2818 = vmatpush.bf16.msra.mxu0 %v2451
    %2819 = vmatpush.bf16.msra.mxu0 %v2447
    %2820 = vmatpush.bf16.msra.mxu0 %v2443
    %2821 = vmatpush.bf16.msra.mxu0 %v2439
    %2822 = vmatpush.bf16.msra.mxu0 %v2435
    %2823 = vmatpush.bf16.msra.mxu0 %v2431
    %2824 = vmatpush.bf16.msra.mxu0 %v2427
    %2825 = vmatmul.bf16.gmra.mxu0 %v1867
    %v2826 = vpop.f32.mrf.mxu0
    %v2827 = vadd.f32 %v2814, %v2826
    %v2828 = vpop.f32.mrf.mxu0
    %2829 = vdwg.mxu0
    %2830 = vmatpush.bf16.msra.mxu0 %v2487
    %2831 = vmatpush.bf16.msra.mxu0 %v2483
    %2832 = vmatpush.bf16.msra.mxu0 %v2479
    %2833 = vmatpush.bf16.msra.mxu0 %v2475
    %2834 = vmatpush.bf16.msra.mxu0 %v2471
    %2835 = vmatpush.bf16.msra.mxu0 %v2467
    %2836 = vmatpush.bf16.msra.mxu0 %v2463
    %2837 = vmatpush.bf16.msra.mxu0 %v2459
    %2838 = vmatmul.bf16.gmra.mxu0 %v1868
    %v2839 = vpop.f32.mrf.mxu0
    %v2840 = vadd.f32 %v2827, %v2839
    %v2841 = vpop.f32.mrf.mxu0
    %2842 = vdwg.mxu0
    %2843 = vmatpush.bf16.msra.mxu0 %v2519
    %2844 = vmatpush.bf16.msra.mxu0 %v2515
    %2845 = vmatpush.bf16.msra.mxu0 %v2511
    %2846 = vmatpush.bf16.msra.mxu0 %v2507
    %2847 = vmatpush.bf16.msra.mxu0 %v2503
    %2848 = vmatpush.bf16.msra.mxu0 %v2499
    %2849 = vmatpush.bf16.msra.mxu0 %v2495
    %2850 = vmatpush.bf16.msra.mxu0 %v2491
    %2851 = vmatmul.bf16.gmra.mxu0 %v1869
    %v2852 = vpop.f32.mrf.mxu0
    %v2853 = vadd.f32 %v2840, %v2852
    %v2854 = vpop.f32.mrf.mxu0
    %2855 = vdwg.mxu0
    %v2856 = vmax.f32 %v2697, 0.0
    %v2857 = vmax.f32 %v2749, 0.0
    %v2858 = vmax.f32 %v2801, 0.0
    %v2859 = vmax.f32 %v2853, 0.0
    %v2860 = vpack.c.bf16 %v2856, %v2856
    %v2861 = vpack.c.bf16 %v2857, %v2857
    %v2862 = vpack.c.bf16 %v2858, %v2858
    %v2863 = vpack.c.bf16 %v2859, %v2859
    %v2864 = vld [vmem:[#allocation11] sm:$0xf]
    %v2865 = vld [vmem:[#allocation11 + $0x4] sm:$0xf]
    %v2866 = vld [vmem:[#allocation11 + $0x8] sm:$0xf]
    %v2867 = vld [vmem:[#allocation11 + $0xc] sm:$0xf]
    %v2868 = vld [vmem:[#allocation11 + $0x10] sm:$0xf]
    %v2869 = vld [vmem:[#allocation11 + $0x14] sm:$0xf]
    %v2870 = vld [vmem:[#allocation11 + $0x18] sm:$0xf]
    %v2871 = vld [vmem:[#allocation11 + $0x1c] sm:$0xf]
    %v2872 = vld [vmem:[#allocation11 + $0x20] sm:$0xf]
    %v2873 = vld [vmem:[#allocation11 + $0x24] sm:$0xf]
    %v2874 = vld [vmem:[#allocation11 + $0x28] sm:$0xf]
    %v2875 = vld [vmem:[#allocation11 + $0x2c] sm:$0xf]
    %v2876 = vld [vmem:[#allocation11 + $0x30] sm:$0xf]
    %v2877 = vld [vmem:[#allocation11 + $0x34] sm:$0xf]
    %v2878 = vld [vmem:[#allocation11 + $0x38] sm:$0xf]
    %v2879 = vld [vmem:[#allocation11 + $0x3c] sm:$0xf]
    %v2880 = vld [vmem:[#allocation11 + $0x40] sm:$0xf]
    %v2881 = vld [vmem:[#allocation11 + $0x44] sm:$0xf]
    %v2882 = vld [vmem:[#allocation11 + $0x48] sm:$0xf]
    %v2883 = vld [vmem:[#allocation11 + $0x4c] sm:$0xf]
    %v2884 = vld [vmem:[#allocation11 + $0x50] sm:$0xf]
    %v2885 = vld [vmem:[#allocation11 + $0x54] sm:$0xf]
    %v2886 = vld [vmem:[#allocation11 + $0x58] sm:$0xf]
    %v2887 = vld [vmem:[#allocation11 + $0x5c] sm:$0xf]
    %v2888 = vld [vmem:[#allocation11 + $0x60] sm:$0xf]
    %v2889 = vld [vmem:[#allocation11 + $0x64] sm:$0xf]
    %v2890 = vld [vmem:[#allocation11 + $0x68] sm:$0xf]
    %v2891 = vld [vmem:[#allocation11 + $0x6c] sm:$0xf]
    %v2892 = vld [vmem:[#allocation11 + $0x70] sm:$0xf]
    %v2893 = vld [vmem:[#allocation11 + $0x74] sm:$0xf]
    %v2894 = vld [vmem:[#allocation11 + $0x78] sm:$0xf]
    %v2895 = vld [vmem:[#allocation11 + $0x7c] sm:$0xf]
    %v2896 = vld [vmem:[#allocation11 + $0x80] sm:$0xf]
    %v2897 = vld [vmem:[#allocation11 + $0x84] sm:$0xf]
    %v2898 = vld [vmem:[#allocation11 + $0x88] sm:$0xf]
    %v2899 = vld [vmem:[#allocation11 + $0x8c] sm:$0xf]
    %v2900 = vld [vmem:[#allocation11 + $0x90] sm:$0xf]
    %v2901 = vld [vmem:[#allocation11 + $0x94] sm:$0xf]
    %v2902 = vld [vmem:[#allocation11 + $0x98] sm:$0xf]
    %v2903 = vld [vmem:[#allocation11 + $0x9c] sm:$0xf]
    %v2904 = vld [vmem:[#allocation11 + $0xa0] sm:$0xf]
    %v2905 = vld [vmem:[#allocation11 + $0xa4] sm:$0xf]
    %v2906 = vld [vmem:[#allocation11 + $0xa8] sm:$0xf]
    %v2907 = vld [vmem:[#allocation11 + $0xac] sm:$0xf]
    %v2908 = vld [vmem:[#allocation11 + $0xb0] sm:$0xf]
    %v2909 = vld [vmem:[#allocation11 + $0xb4] sm:$0xf]
    %v2910 = vld [vmem:[#allocation11 + $0xb8] sm:$0xf]
    %v2911 = vld [vmem:[#allocation11 + $0xbc] sm:$0xf]
    %v2912 = vld [vmem:[#allocation11 + $0xc0] sm:$0xf]
    %v2913 = vld [vmem:[#allocation11 + $0xc4] sm:$0xf]
    %v2914 = vld [vmem:[#allocation11 + $0xc8] sm:$0xf]
    %v2915 = vld [vmem:[#allocation11 + $0xcc] sm:$0xf]
    %v2916 = vld [vmem:[#allocation11 + $0xd0] sm:$0xf]
    %v2917 = vld [vmem:[#allocation11 + $0xd4] sm:$0xf]
    %v2918 = vld [vmem:[#allocation11 + $0xd8] sm:$0xf]
    %v2919 = vld [vmem:[#allocation11 + $0xdc] sm:$0xf]
    %v2920 = vld [vmem:[#allocation11 + $0xe0] sm:$0xf]
    %v2921 = vld [vmem:[#allocation11 + $0xe4] sm:$0xf]
    %v2922 = vld [vmem:[#allocation11 + $0xe8] sm:$0xf]
    %v2923 = vld [vmem:[#allocation11 + $0xec] sm:$0xf]
    %v2924 = vld [vmem:[#allocation11 + $0xf0] sm:$0xf]
    %v2925 = vld [vmem:[#allocation11 + $0xf4] sm:$0xf]
    %v2926 = vld [vmem:[#allocation11 + $0xf8] sm:$0xf]
    %v2927 = vld [vmem:[#allocation11 + $0xfc] sm:$0xf]
    %v2928 = vld [vmem:[%s6] sm:$0x1]
    %v2930 = vperm.slane %v2928, 0
    %v2996 = vunpack.c.l.b16 %v2864
    %v2997 = vunpack.c.l.b16 %v2865
    %v2998 = vunpack.c.l.b16 %v2866
    %v2999 = vunpack.c.l.b16 %v2867
    %v3000 = vunpack.c.l.b16 %v2868
    %v3001 = vunpack.c.l.b16 %v2869
    %v3002 = vunpack.c.l.b16 %v2870
    %v3003 = vunpack.c.l.b16 %v2871
    %v3004 = vunpack.c.l.b16 %v2872
    %v3005 = vunpack.c.l.b16 %v2873
    %v3006 = vunpack.c.l.b16 %v2874
    %v3007 = vunpack.c.l.b16 %v2875
    %v3008 = vunpack.c.l.b16 %v2876
    %v3009 = vunpack.c.l.b16 %v2877
    %v3010 = vunpack.c.l.b16 %v2878
    %v3011 = vunpack.c.l.b16 %v2879
    %v3012 = vunpack.c.l.b16 %v2880
    %v3013 = vunpack.c.l.b16 %v2881
    %v3014 = vunpack.c.l.b16 %v2882
    %v3015 = vunpack.c.l.b16 %v2883
    %v3016 = vunpack.c.l.b16 %v2884
    %v3017 = vunpack.c.l.b16 %v2885
    %v3018 = vunpack.c.l.b16 %v2886
    %v3019 = vunpack.c.l.b16 %v2887
    %v3020 = vunpack.c.l.b16 %v2888
    %v3021 = vunpack.c.l.b16 %v2889
    %v3022 = vunpack.c.l.b16 %v2890
    %v3023 = vunpack.c.l.b16 %v2891
    %v3024 = vunpack.c.l.b16 %v2892
    %v3025 = vunpack.c.l.b16 %v2893
    %v3026 = vunpack.c.l.b16 %v2894
    %v3027 = vunpack.c.l.b16 %v2895
    %v3028 = vunpack.c.l.b16 %v2896
    %v3029 = vunpack.c.l.b16 %v2897
    %v3030 = vunpack.c.l.b16 %v2898
    %v3031 = vunpack.c.l.b16 %v2899
    %v3032 = vunpack.c.l.b16 %v2900
    %v3033 = vunpack.c.l.b16 %v2901
    %v3034 = vunpack.c.l.b16 %v2902
    %v3035 = vunpack.c.l.b16 %v2903
    %v3036 = vunpack.c.l.b16 %v2904
    %v3037 = vunpack.c.l.b16 %v2905
    %v3038 = vunpack.c.l.b16 %v2906
    %v3039 = vunpack.c.l.b16 %v2907
    %v3040 = vunpack.c.l.b16 %v2908
    %v3041 = vunpack.c.l.b16 %v2909
    %v3042 = vunpack.c.l.b16 %v2910
    %v3043 = vunpack.c.l.b16 %v2911
    %v3044 = vunpack.c.l.b16 %v2912
    %v3045 = vunpack.c.l.b16 %v2913
    %v3046 = vunpack.c.l.b16 %v2914
    %v3047 = vunpack.c.l.b16 %v2915
    %v3048 = vunpack.c.l.b16 %v2916
    %v3049 = vunpack.c.l.b16 %v2917
    %v3050 = vunpack.c.l.b16 %v2918
    %v3051 = vunpack.c.l.b16 %v2919
    %v3052 = vunpack.c.l.b16 %v2920
    %v3053 = vunpack.c.l.b16 %v2921
    %v3054 = vunpack.c.l.b16 %v2922
    %v3055 = vunpack.c.l.b16 %v2923
    %v3056 = vunpack.c.l.b16 %v2924
    %v3057 = vunpack.c.l.b16 %v2925
    %v3058 = vunpack.c.l.b16 %v2926
    %v3059 = vunpack.c.l.b16 %v2927
    %v3060 = vpack.c.b16 %v2997, %v2996
    %v3061 = vpack.c.b16 %v2999, %v2998
    %v3062 = vpack.c.b16 %v3001, %v3000
    %v3063 = vpack.c.b16 %v3003, %v3002
    %v3064 = vpack.c.b16 %v3005, %v3004
    %v3065 = vpack.c.b16 %v3007, %v3006
    %v3066 = vpack.c.b16 %v3009, %v3008
    %v3067 = vpack.c.b16 %v3011, %v3010
    %v3068 = vpack.c.b16 %v3013, %v3012
    %v3069 = vpack.c.b16 %v3015, %v3014
    %v3070 = vpack.c.b16 %v3017, %v3016
    %v3071 = vpack.c.b16 %v3019, %v3018
    %v3072 = vpack.c.b16 %v3021, %v3020
    %v3073 = vpack.c.b16 %v3023, %v3022
    %v3074 = vpack.c.b16 %v3025, %v3024
    %v3075 = vpack.c.b16 %v3027, %v3026
    %v3076 = vpack.c.b16 %v3029, %v3028
    %v3077 = vpack.c.b16 %v3031, %v3030
    %v3078 = vpack.c.b16 %v3033, %v3032
    %v3079 = vpack.c.b16 %v3035, %v3034
    %v3080 = vpack.c.b16 %v3037, %v3036
    %v3081 = vpack.c.b16 %v3039, %v3038
    %v3082 = vpack.c.b16 %v3041, %v3040
    %v3083 = vpack.c.b16 %v3043, %v3042
    %v3084 = vpack.c.b16 %v3045, %v3044
    %v3085 = vpack.c.b16 %v3047, %v3046
    %v3086 = vpack.c.b16 %v3049, %v3048
    %v3087 = vpack.c.b16 %v3051, %v3050
    %v3088 = vpack.c.b16 %v3053, %v3052
    %v3089 = vpack.c.b16 %v3055, %v3054
    %v3090 = vpack.c.b16 %v3057, %v3056
    %v3091 = vpack.c.b16 %v3059, %v3058
    %3124 = vmatpush.bf16.msra.mxu0 %v3067
    %3125 = vmatpush.bf16.msra.mxu0 %v3066
    %3126 = vmatpush.bf16.msra.mxu0 %v3065
    %3127 = vmatpush.bf16.msra.mxu0 %v3064
    %3128 = vmatpush.bf16.msra.mxu0 %v3063
    %3129 = vmatpush.bf16.msra.mxu0 %v3062
    %3130 = vmatpush.bf16.msra.mxu0 %v3061
    %3131 = vmatpush.bf16.msra.mxu0 %v3060
    %3132 = vmatmul.bf16.gmra.mxu0 %v2860
    %v3133 = vpop.f32.mrf.mxu0
    %v3134 = vadd.f32 %v2930, %v3133
    %v3135 = vpop.f32.mrf.mxu0
    %3136 = vdwg.mxu0
    %3137 = vmatpush.bf16.msra.mxu0 %v3075
    %3138 = vmatpush.bf16.msra.mxu0 %v3074
    %3139 = vmatpush.bf16.msra.mxu0 %v3073
    %3140 = vmatpush.bf16.msra.mxu0 %v3072
    %3141 = vmatpush.bf16.msra.mxu0 %v3071
    %3142 = vmatpush.bf16.msra.mxu0 %v3070
    %3143 = vmatpush.bf16.msra.mxu0 %v3069
    %3144 = vmatpush.bf16.msra.mxu0 %v3068
    %3145 = vmatmul.bf16.gmra.mxu0 %v2861
    %v3146 = vpop.f32.mrf.mxu0
    %v3147 = vadd.f32 %v3134, %v3146
    %v3148 = vpop.f32.mrf.mxu0
    %3149 = vdwg.mxu0
    %3150 = vmatpush.bf16.msra.mxu0 %v3083
    %3151 = vmatpush.bf16.msra.mxu0 %v3082
    %3152 = vmatpush.bf16.msra.mxu0 %v3081
    %3153 = vmatpush.bf16.msra.mxu0 %v3080
    %3154 = vmatpush.bf16.msra.mxu0 %v3079
    %3155 = vmatpush.bf16.msra.mxu0 %v3078
    %3156 = vmatpush.bf16.msra.mxu0 %v3077
    %3157 = vmatpush.bf16.msra.mxu0 %v3076
    %3158 = vmatmul.bf16.gmra.mxu0 %v2862
    %v3159 = vpop.f32.mrf.mxu0
    %v3160 = vadd.f32 %v3147, %v3159
    %v3161 = vpop.f32.mrf.mxu0
    %3162 = vdwg.mxu0
    %3163 = vmatpush.bf16.msra.mxu0 %v3091
    %3164 = vmatpush.bf16.msra.mxu0 %v3090
    %3165 = vmatpush.bf16.msra.mxu0 %v3089
    %3166 = vmatpush.bf16.msra.mxu0 %v3088
    %3167 = vmatpush.bf16.msra.mxu0 %v3087
    %3168 = vmatpush.bf16.msra.mxu0 %v3086
    %3169 = vmatpush.bf16.msra.mxu0 %v3085
    %3170 = vmatpush.bf16.msra.mxu0 %v3084
    %3171 = vmatmul.bf16.gmra.mxu0 %v2863
    %v3172 = vpop.f32.mrf.mxu0
    %v3173 = vadd.f32 %v3160, %v3172
    %v3174 = vpop.f32.mrf.mxu0
    %3175 = vdwg.mxu0
    %3176 = vst [vmem:[#allocation13] sm:$0xff] %v3173
    // Predicated region
    $region54: #{tpu_custom_call.1} parent=1 // pred_check
      _
    $region55: #{tpu_custom_call.1} parent=1 // pred_check_branch
      %3178 = sbr.rel (0) target = $region57
    $region56: #{tpu_custom_call.1} parent=1 // pred_region
      %3180 = vsyncadd [#allocation4], 0
      %s3182 = sshll.u32 [#allocation13], 4
      %s3183 = int_to_ptr.vmem [resolvable:$true] %s3182
      %s3184 = sshll.u32 %s7, 4
      %s3185 = int_to_ptr.hbm [resolvable:$true] %s3184
      %3187 = dma.vmem_to_hbm [thread:$0]  %s3183, 128, %s3185, [#allocation4]
    $region57: #{tpu_custom_call.1} parent=1 // pred_fallthru
      _
    // Predicated region
    $region58: #{tpu_custom_call.1} parent=1 // pred_check
      _
    $region59: #{tpu_custom_call.1} parent=1 // pred_check_branch
      %3189 = sbr.rel (0) target = $region61
    $region60: #{tpu_custom_call.1} parent=1 // pred_region
      %3191 = dma.done [#allocation4], 128
    $region61: #{tpu_custom_call.1} parent=1 // pred_fallthru
      _
    %3192 = vsyncpa [#allocation3], 1
    %3193 = vsyncpa [#allocation6], 1
    %3194 = vsyncpa [#allocation9], 1
    %3195 = vsyncpa [#allocation12], 1
    %3196 = vsyncpa [#allocation4], 1

</llo_original>
